<compile_context>
chip_gen: v5e
topology: v5e:2x2
jax: 0.10.0
libtpu: 0.0.40
codegen_flags: <defaults>
</compile_context>

<pallas_src>
import jax
import jax.numpy as jnp
import numpy as np
from jax.experimental import pallas as pl
from jax.experimental.pallas import tpu as pltpu

EPS = 1e-10
_VMEM_LIMIT = 40 * 1024 * 1024   # fits under v7x's 64 MiB physical VMEM


def _relu(x):
    return jnp.maximum(x, 0.0)


def _leaky(x):
    return jnp.where(x > 0, x, 0.2 * x)


def _round_up(n, m):
    return ((n + m - 1) // m) * m


def _pad_to(x, shape):
    if tuple(x.shape) == tuple(shape):
        return x
    pads = [(0, s - d) for d, s in zip(x.shape, shape)]
    return jnp.pad(x, pads)


def _choose_row_tile(R, cap):
    """8-aligned row tile; >= 2 grid steps when R allows it (v7x megacore)."""
    if R <= 8:
        return R, R
    tr = min(cap, max(8, _round_up(-(-R // 2), 8)))
    return tr, _round_up(R, tr)


# ---------------------------------------------------------------------------
# Kernel 1: fused g_v MLP + attention + aggregation (item agg & social level 1)
#   q, e : (TR, L, D)  gathered item / rate embeddings
#   u    : (TR, D)     per-row target-user embedding
#   mask : (TR, L)     lane-major validity mask
#   packed host weights:
#     w2s     = [gw2 | gw2@wcx]   (D, 2D)   -> hx = [x | x@wcx + bc]
#     wcp_pad = [0   | wcp    ]   (D, 2D)   -> per-row p-path lands in top lanes
#     wa2_pad = [0   | wa2    ]   (1, 2D)   -> score reduce ignores the x half
#     wg_pad  = [wg  ; 0      ]   (2D, D)   -> junk lanes of packed agg zeroed
# ---------------------------------------------------------------------------
def _fused_gv_att_kernel(q_ref, e_ref, u_ref, mask_ref,
                         gw1q_ref, gw1e_ref, gb1_ref,
                         w2s_ref, b2s_ref,
                         wcp_pad_ref, wa2_pad_ref, ba2_ref,
                         wg_pad_ref, bg_ref, o_ref):
    TR, L, D = q_ref.shape
    D2 = w2s_ref.shape[1]              # 2*D packed width
    M = TR * L
    cdt = gw1q_ref.dtype               # matmul operand dtype (f32 or bf16)

    q2 = q_ref[...].reshape(M, D)      # relabel-only (L padded to mult of 8)
    e2 = e_ref[...].reshape(M, D)

    # ---- g_v layer 1 (concat-free): LeakyReLU([q|e] @ gw1 + gb1) ----
    h = (jnp.dot(q2, gw1q_ref[...], preferred_element_type=jnp.float32)
         + jnp.dot(e2, gw1e_ref[...], preferred_element_type=jnp.float32)
         + gb1_ref[...])
    h = jnp.where(h > 0, h, 0.2 * h)

    # ---- packed g_v layer 2 + attention-x preactivation in ONE matmul ----
    # hx[:, :D] = x = h@gw2 + gb2 ;  hx[:, D:] = x@wcx + bc
    hx = jnp.dot(h.astype(cdt), w2s_ref[...],
                 preferred_element_type=jnp.float32) + b2s_ref[...]
    hx3 = hx.reshape(TR, L, D2)

    # ---- p-path hoisted to one per-row matmul (mask on p is redundant) ----
    up = jnp.dot(u_ref[...], wcp_pad_ref[...],
                 preferred_element_type=jnp.float32)            # (TR, 2D), [:, :D] == 0

    # ---- attention MLP: score = LeakyReLU(x@wcx + u@wcp + bc) @ wa2 + ba2 ----
    t = hx3 + up.reshape(TR, 1, D2)                             # broadcast over L
    t = jnp.where(t > 0, t, 0.2 * t)                            # lanes [:D] ignored
    score = (jnp.sum(t * wa2_pad_ref[...].reshape(1, 1, D2), axis=2)
             + ba2_ref[...])                                    # (TR, L) lane-major

    # ---- masked exp-normalize (exact torch semantics: no max-subtract) ----
    alpha = jnp.exp(score) * mask_ref[...]                      # (TR, L)
    denom = jnp.sum(alpha, axis=1, keepdims=True) + EPS         # (TR, 1)
    w = alpha / denom                                           # exact division

    # ---- attention-weighted sum + output Linear + ReLU ----
    aggp = jnp.sum(w[:, :, None] * hx3, axis=1)                 # (TR, 2D); [:, D:] junk
    out = (jnp.dot(aggp.astype(cdt), wg_pad_ref[...],
                   preferred_element_type=jnp.float32) + bg_ref[...])
    o_ref[...] = jnp.maximum(out, 0.0)


# ---------------------------------------------------------------------------
# Kernel 2: attention + aggregation only (level-2 social; per-entry p, no mask
#           multiply on p in the reference either)
# ---------------------------------------------------------------------------
def _att_agg_kernel(x_ref, p_ref, mask_ref,
                    wcx_ref, wcp_ref, bc_ref, wa2_ref, ba2_ref,
                    wg_ref, bg_ref, o_ref):
    TR, L, D = x_ref.shape
    M = TR * L
    cdt = wcx_ref.dtype
    x2 = x_ref[...].reshape(M, D)
    p2 = p_ref[...].reshape(M, D)

    h1 = (jnp.dot(x2, wcx_ref[...], preferred_element_type=jnp.float32)
          + jnp.dot(p2, wcp_ref[...], preferred_element_type=jnp.float32)
          + bc_ref[...])
    h1 = jnp.where(h1 > 0, h1, 0.2 * h1)
    score = (jnp.sum(h1.reshape(TR, L, D) * wa2_ref[...].reshape(1, 1, D), axis=2)
             + ba2_ref[...])                                    # (TR, L)

    alpha = jnp.exp(score) * mask_ref[...]
    denom = jnp.sum(alpha, axis=1, keepdims=True) + EPS
    w = alpha / denom

    x3 = x_ref[...].astype(jnp.float32).reshape(TR, L, D)
    agg = jnp.sum(w[:, :, None] * x3, axis=1)                   # (TR, D)
    out = (jnp.dot(agg.astype(cdt), wg_ref[...],
                   preferred_element_type=jnp.float32) + bg_ref[...])
    o_ref[...] = jnp.maximum(out, 0.0)


# ---------------------------------------------------------------------------
# Kernel 3: concat-free combine MLP: ReLU(ReLU([a|b] @ W1 + b1) @ W2 + b2)
# ---------------------------------------------------------------------------
def _combine_kernel(a_ref, b_ref, w1a_ref, w1b_ref, b1_ref, w2_ref, b2_ref, o_ref):
    cdt = w2_ref.dtype
    h = (jnp.dot(a_ref[...], w1a_ref[...], preferred_element_type=jnp.float32)
         + jnp.dot(b_ref[...], w1b_ref[...], preferred_element_type=jnp.float32)
         + b1_ref[...])
    h = jnp.maximum(h, 0.0)
    o = (jnp.dot(h.astype(cdt), w2_ref[...], preferred_element_type=jnp.float32)
         + b2_ref[...])
    o_ref[...] = jnp.maximum(o, 0.0)


# ---------------------------------------------------------------------------
# Host-side weight folding
# ---------------------------------------------------------------------------
def _fold_att_weights(wlin, att):
    """Fold the shared Linear w(.) into the first attention layer (exact)."""
    ww, bw = wlin                      # (D, D), (1, D)
    wa1, ba1, wa2, ba2 = att           # (2D, D), (1, D), (1, D), (1, 1)
    D = ww.shape[0]
    wcx = ww @ wa1[:D]
    wcp = ww @ wa1[D:]
    bc = bw @ (wa1[:D] + wa1[D:]) + ba1
    return wcx, wcp, bc, wa2, ba2


# ---------------------------------------------------------------------------
# Wrappers
# ---------------------------------------------------------------------------
def fused_gv_att_pallas(q, e, u, mask, gv, wlin, att, agg, *,
                        tile_cap=256, matmul_dtype=jnp.float32):
    R, L, D = q.shape
    f32 = jnp.float32
    gw1, gb1, gw2, gb2 = gv
    wcx, wcp, bc, wa2, ba2 = _fold_att_weights(wlin, att)
    wg, bg = agg

    # packed weights (built once per call on tiny host tensors, in f32)
    w2s = jnp.concatenate([gw2, gw2 @ wcx], axis=1)                    # (D, 2D)
    b2s = jnp.concatenate([gb2, gb2 @ wcx + bc], axis=1)               # (1, 2D)
    wcp_pad = jnp.concatenate([jnp.zeros((D, D), f32), wcp], axis=1)   # (D, 2D)
    wa2_pad = jnp.concatenate([jnp.zeros((1, D), f32), wa2], axis=1)   # (1, 2D)
    wg_pad = jnp.concatenate([wg, jnp.zeros((D, D), f32)], axis=0)     # (2D, D)

    # host-side padding: L -> mult of 8 (relabel reshapes), R -> tile multiple
    L_pad = max(8, _round_up(L, 8))
    TR, R_pad = _choose_row_tile(R, tile_cap)
    cd = matmul_dtype
    q = _pad_to(q.astype(cd), (R_pad, L_pad, D))
    e = _pad_to(e.astype(cd), (R_pad, L_pad, D))
    u = _pad_to(u.astype(cd), (R_pad, D))
    mask = _pad_to(mask.astype(f32), (R_pad, L_pad))

    grid = (R_pad // TR,)
    const2 = lambda i: (0, 0)
    out = pl.pallas_call(
        _fused_gv_att_kernel,
        out_shape=jax.ShapeDtypeStruct((R_pad, D), f32),
        grid_spec=pltpu.PrefetchScalarGridSpec(
            num_scalar_prefetch=0,
            grid=grid,
            in_specs=[
                pl.BlockSpec((TR, L_pad, D), lambda i: (i, 0, 0)),   # q
                pl.BlockSpec((TR, L_pad, D), lambda i: (i, 0, 0)),   # e (rate emb)
                pl.BlockSpec((TR, D), lambda i: (i, 0)),             # u (per-row user)
                pl.BlockSpec((TR, L_pad), lambda i: (i, 0)),         # mask (lane-major)
                pl.BlockSpec((D, D), const2),                        # gw1 (q half)
                pl.BlockSpec((D, D), const2),                        # gw1 (rate half)
                pl.BlockSpec((1, D), const2),                        # gb1
                pl.BlockSpec((D, 2 * D), const2),                    # w2s
                pl.BlockSpec((1, 2 * D), const2),                    # b2s
                pl.BlockSpec((D, 2 * D), const2),                    # wcp_pad
                pl.BlockSpec((1, 2 * D), const2),                    # wa2_pad
                pl.BlockSpec((1, 1), const2),                        # ba2
                pl.BlockSpec((2 * D, D), const2),                    # wg_pad
                pl.BlockSpec((1, D), const2),                        # bg
            ],
            out_specs=pl.BlockSpec((TR, D), lambda i: (i, 0)),
        ),
        compiler_params=pltpu.CompilerParams(
            dimension_semantics=("parallel",),
            vmem_limit_bytes=_VMEM_LIMIT),
    )(q, e, u, mask,
      gw1[:D].astype(cd), gw1[D:].astype(cd), gb1,
      w2s.astype(cd), b2s, wcp_pad.astype(cd), wa2_pad, ba2,
      wg_pad.astype(cd), bg)
    return out[:R]


def att_agg_pallas(x, p, mask, wlin, att, agg, *,
                   tile_cap=256, matmul_dtype=jnp.float32):
    R, L, D = x.shape
    f32 = jnp.float32
    wcx, wcp, bc, wa2, ba2 = _fold_att_weights(wlin, att)
    wg, bg = agg

    L_pad = max(8, _round_up(L, 8))
    TR, R_pad = _choose_row_tile(R, tile_cap)
    cd = matmul_dtype
    x = _pad_to(x.astype(cd), (R_pad, L_pad, D))
    p = _pad_to(p.astype(cd), (R_pad, L_pad, D))
    mask = _pad_to(mask.astype(f32), (R_pad, L_pad))

    grid = (R_pad // TR,)
    const2 = lambda i: (0, 0)
    out = pl.pallas_call(
        _att_agg_kernel,
        out_shape=jax.ShapeDtypeStruct((R_pad, D), f32),
        grid_spec=pltpu.PrefetchScalarGridSpec(
            num_scalar_prefetch=0,
            grid=grid,
            in_specs=[
                pl.BlockSpec((TR, L_pad, D), lambda i: (i, 0, 0)),   # x
                pl.BlockSpec((TR, L_pad, D), lambda i: (i, 0, 0)),   # p
                pl.BlockSpec((TR, L_pad), lambda i: (i, 0)),         # mask
                pl.BlockSpec((D, D), const2),                        # wcx
                pl.BlockSpec((D, D), const2),                        # wcp
                pl.BlockSpec((1, D), const2),                        # bc
                pl.BlockSpec((1, D), const2),                        # wa2
                pl.BlockSpec((1, 1), const2),                        # ba2
                pl.BlockSpec((D, D), const2),                        # wg
                pl.BlockSpec((1, D), const2),                        # bg
            ],
            out_specs=pl.BlockSpec((TR, D), lambda i: (i, 0)),
        ),
        compiler_params=pltpu.CompilerParams(
            dimension_semantics=("parallel",),
            vmem_limit_bytes=_VMEM_LIMIT),
    )(x, p, mask, wcx.astype(cd), wcp.astype(cd), bc, wa2, ba2,
      wg.astype(cd), bg)
    return out[:R]


def combine_pallas(h_a, h_b, cw1, cb1, cw2, cb2, *,
                   tile_cap=512, matmul_dtype=jnp.float32):
    # TODO(synk): Dropout(0.5) layers in combine_mlp are identity (eval mode).
    N, D = h_a.shape
    Dh = cw1.shape[1]
    Dout = cw2.shape[1]
    f32 = jnp.float32
    cd = matmul_dtype
    TN, N_pad = _choose_row_tile(N, tile_cap)
    h_a = _pad_to(h_a.astype(cd), (N_pad, D))
    h_b = _pad_to(h_b.astype(cd), (N_pad, D))

    grid = (N_pad // TN,)
    const2 = lambda i: (0, 0)
    out = pl.pallas_call(
        _combine_kernel,
        out_shape=jax.ShapeDtypeStruct((N_pad, Dout), f32),
        grid_spec=pltpu.PrefetchScalarGridSpec(
            num_scalar_prefetch=0,
            grid=grid,
            in_specs=[
                pl.BlockSpec((TN, D), lambda i: (i, 0)),             # h_iI
                pl.BlockSpec((TN, D), lambda i: (i, 0)),             # h_iS
                pl.BlockSpec((D, Dh), const2),                       # cw1 (h_iI half)
                pl.BlockSpec((D, Dh), const2),                       # cw1 (h_iS half)
                pl.BlockSpec((1, Dh), const2),                       # cb1
                pl.BlockSpec((Dh, Dout), const2),                    # cw2
                pl.BlockSpec((1, Dout), const2),                     # cb2
            ],
            out_specs=pl.BlockSpec((TN, Dout), lambda i: (i, 0)),
        ),
        compiler_params=pltpu.CompilerParams(
            dimension_semantics=("parallel",),
            vmem_limit_bytes=_VMEM_LIMIT),
    )(h_a, h_b, cw1[:D].astype(cd), cw1[D:].astype(cd), cb1,
      cw2.astype(cd), cb2)
    return out[:N]


# ---------------------------------------------------------------------------
# Forward pass (embedding gathers stay in plain JAX; hot path in Pallas)
# ---------------------------------------------------------------------------
def user_model_forward(params, uids, u_item_pad, u_user_pad, u_user_item_pad,
                       *, matmul_dtype=jnp.float32):
    cd = matmul_dtype
    user_emb = params["user_emb"].astype(cd)   # cast tables before gather: halves
    item_emb = params["item_emb"].astype(cd)   # HBM traffic of the gathered tensors
    rate_emb = params["rate_emb"].astype(cd)   # when cd == bf16 (v6e / v7x)
    D = user_emb.shape[1]
    B, I, _ = u_item_pad.shape
    U = u_user_pad.shape[1]
    I2 = u_user_item_pad.shape[2]

    # ---------------- item aggregation (fused g_v + attention + aggregate) ----
    q_a = item_emb[u_item_pad[:, :, 0]]                        # (B, I, D)
    e_r = rate_emb[u_item_pad[:, :, 1]]                        # (B, I, D)
    mask_u = (u_item_pad[:, :, 0] > 0).astype(jnp.float32)     # (B, I)
    h_iI = fused_gv_att_pallas(q_a, e_r, user_emb[uids], mask_u,
                               params["g_v"], params["w1"],
                               params["user_items_att"], params["aggre_items"],
                               matmul_dtype=cd)
    # TODO(synk): F.dropout(h_iI, 0.5) -> identity (eval mode)

    # ---------------- social aggregation, level 1 (neighbours' items) ---------
    q_a_s = item_emb[u_user_item_pad[:, :, :, 0]].reshape(B * U, I2, D)
    e_r_s = rate_emb[u_user_item_pad[:, :, :, 1]].reshape(B * U, I2, D)
    mask_s = (u_user_item_pad[:, :, :, 0] > 0).astype(jnp.float32).reshape(B * U, I2)
    u_nb = user_emb[u_user_pad].reshape(B * U, D)
    h_oI = fused_gv_att_pallas(q_a_s, e_r_s, u_nb, mask_s,
                               params["g_v"], params["w4"],
                               params["user_items_att_s1"],
                               params["aggre_items_s1"],
                               matmul_dtype=cd).reshape(B, U, D)
    # TODO(synk): F.dropout(h_oI, 0.5) -> identity (eval mode)

    # ---------------- social aggregation, level 2 (neighbours) ---------------
    mask_su = (u_user_pad > 0).astype(jnp.float32)             # (B, U)
    p_u = user_emb[u_user_pad]                                 # (B, U, D)
    h_iS = att_agg_pallas(h_oI, p_u, mask_su,
                          params["w5"], params["user_users_att_s2"],
                          params["aggre_neighbors_s2"], matmul_dtype=cd)
    # TODO(synk): F.dropout(h_iS, 0.5) -> identity (eval mode)

    # ---------------- combine ----------------
    cw1, cb1, cw2, cb2 = params["combine_mlp"]
    return combine_pallas(h_iI, h_iS, cw1, cb1, cw2, cb2, matmul_dtype=cd)


# ---------------------------------------------------------------------------
# Pure-JAX reference (literal torch semantics; used only to validate kernels)
# ---------------------------------------------------------------------------
def ref_forward(params, uids, u_item_pad, u_user_pad, u_user_item_pad):
    user_emb = params["user_emb"]
    item_emb = params["item_emb"]
    rate_emb = params["rate_emb"]
    D = user_emb.shape[1]
    B, I, _ = u_item_pad.shape
    U = u_user_pad.shape[1]
    I2 = u_user_item_pad.shape[2]
    gw1, gb1, gw2, gb2 = params["g_v"]

    def gv(x):
        return _leaky(x @ gw1 + gb1) @ gw2 + gb2

    def att(x, p, mask, wlin, attp, aggp):
        R, L, Dd = x.shape
        ww, bw = wlin
        wa1, ba1, wa2, ba2 = attp
        wg, bg = aggp
        wx = x.reshape(-1, Dd) @ ww + bw
        wp = p.reshape(-1, Dd) @ ww + bw
        h1 = _leaky(jnp.concatenate([wx, wp], axis=1) @ wa1 + ba1)
        score = (h1 @ wa2.T + ba2).reshape(R, L)
        alpha = jnp.exp(score) * mask
        alpha = alpha / (jnp.sum(alpha, axis=1, keepdims=True) + EPS)
        agg = jnp.einsum("rl,rld->rd", alpha, x)
        return _relu(agg @ wg + bg)

    q_a = item_emb[u_item_pad[:, :, 0]]
    mask_u = (u_item_pad[:, :, 0] > 0).astype(jnp.float32)
    e_r = rate_emb[u_item_pad[:, :, 1]]
    x_ia = gv(jnp.concatenate([q_a, e_r], axis=2).reshape(-1, 2 * D)).reshape(B, I, D)
    p_i = mask_u[:, :, None] * user_emb[uids][:, None, :]
    h_iI = att(x_ia, p_i, mask_u, params["w1"],
               params["user_items_att"], params["aggre_items"])

    q_a_s = item_emb[u_user_item_pad[:, :, :, 0]]
    mask_s = (u_user_item_pad[:, :, :, 0] > 0).astype(jnp.float32)
    e_r_s = rate_emb[u_user_item_pad[:, :, :, 1]]
    x_ia_s = gv(jnp.concatenate([q_a_s, e_r_s], axis=3).reshape(-1, 2 * D)).reshape(B, U, I2, D)
    p_i_s = mask_s[..., None] * user_emb[u_user_pad][:, :, None, :]
    h_oI = att(x_ia_s.reshape(B * U, I2, D), p_i_s.reshape(B * U, I2, D),
               mask_s.reshape(B * U, I2), params["w4"],
               params["user_items_att_s1"], params["aggre_items_s1"]).reshape(B, U, D)

    mask_su = (u_user_pad > 0).astype(jnp.float32)
    p_u = user_emb[u_user_pad]
    h_iS = att(h_oI, p_u, mask_su, params["w5"],
               params["user_users_att_s2"], params["aggre_neighbors_s2"])

    cw1, cb1, cw2, cb2 = params["combine_mlp"]
    return _relu(_relu(jnp.concatenate([h_iI, h_iS], axis=1) @ cw1 + cb1) @ cw2 + cb2)


# ---------------------------------------------------------------------------
# Deterministic parameter initialization (synthetic; no checkpoint loading)
# ---------------------------------------------------------------------------
def init_params(key, D, n_users, n_items, n_rates):
    ks = iter(jax.random.split(key, 64))

    def lin(din, dout, scale=0.05):
        w = jax.random.normal(next(ks), (din, dout), jnp.float32) * scale
        b = jax.random.normal(next(ks), (1, dout), jnp.float32) * scale
        return (w, b)

    def att_mlp(din):  # _MultiLayerPercep(din, 1): Linear(din, din//2), LeakyReLU, Linear(din//2, 1)
        w1, b1 = lin(din, din // 2)
        w2 = jax.random.normal(next(ks), (1, din // 2), jnp.float32) * 0.05
        b2 = jax.random.normal(next(ks), (1, 1), jnp.float32) * 0.05
        return (w1, b1, w2, b2)

    return {
        "user_emb": jax.random.normal(next(ks), (n_users, D), jnp.float32) * 0.1,
        "item_emb": jax.random.normal(next(ks), (n_items, D), jnp.float32) * 0.1,
        "rate_emb": jax.random.normal(next(ks), (n_rates, D), jnp.float32) * 0.1,
        "w1": lin(D, D),
        "w4": lin(D, D),
        "w5": lin(D, D),
        "g_v": lin(2 * D, D) + lin(D, D),
        "user_items_att": att_mlp(2 * D),
        "aggre_items": lin(D, D),
        "user_items_att_s1": att_mlp(2 * D),
        "aggre_items_s1": lin(D, D),
        "user_users_att_s2": att_mlp(2 * D),
        "aggre_neighbors_s2": lin(D, D),
        "combine_mlp": lin(2 * D, 2 * D) + lin(2 * D, D),
    }


if __name__ == "__main__":
    key = jax.random.PRNGKey(0)
    D, B, I, U, I2 = 32, 8, 16, 8, 16
    n_users, n_items, n_rates = 40, 60, 6

    kp, kd = jax.random.split(key)
    params = init_params(kp, D, n_users, n_items, n_rates)

    k1, k2, k3, k4, k5, k6 = jax.random.split(kd, 6)
    uids = jax.random.randint(k1, (B,), 1, n_users)
    u_item_pad = jnp.stack(
        [jax.random.randint(k2, (B, I), 0, n_items),
         jax.random.randint(k3, (B, I), 0, n_rates)], axis=2)
    u_user_pad = jax.random.randint(k4, (B, U), 0, n_users)
    u_user_item_pad = jnp.stack(
        [jax.random.randint(k5, (B, U, I2), 0, n_items),
         jax.random.randint(k6, (B, U, I2), 0, n_rates)], axis=3)

    # f32 matmul path (exact reference semantics)
    out = user_model_forward(params, uids, u_item_pad, u_user_pad, u_user_item_pad)
    out = jax.block_until_ready(out)

    ref = ref_forward(params, uids, u_item_pad, u_user_pad, u_user_item_pad)
    ref = jax.block_until_ready(ref)

    assert out.shape == (B, D), out.shape
    if not np.allclose(np.asarray(out), np.asarray(ref), rtol=2e-2, atol=2e-3):
        raise AssertionError("Pallas output mismatch vs JAX reference (f32 path)")

    # bf16 matmul-operand path (production setting for v6e / v7x) — loose check
    out_bf = user_model_forward(params, uids, u_item_pad, u_user_pad,
                                u_user_item_pad, matmul_dtype=jnp.bfloat16)
    out_bf = jax.block_until_ready(out_bf)
    if not np.allclose(np.asarray(out_bf), np.asarray(ref), rtol=1e-1, atol=2e-2):
        raise AssertionError("Pallas output mismatch vs JAX reference (bf16 path)")

    print("KERNEL_OK")
</pallas_src>

<mosaic_0001>
module attributes {stable_mosaic.version = 11 : i64} {
  func.func @_fused_gv_att_kernel(%arg0: i32, %arg1: memref<8x16x32xf32, #tpu.memory_space<vmem>>, %arg2: memref<8x16x32xf32, #tpu.memory_space<vmem>>, %arg3: memref<8x32xf32, #tpu.memory_space<vmem>>, %arg4: memref<8x16xf32, #tpu.memory_space<vmem>>, %arg5: memref<32x32xf32, #tpu.memory_space<vmem>>, %arg6: memref<32x32xf32, #tpu.memory_space<vmem>>, %arg7: memref<1x32xf32, #tpu.memory_space<vmem>>, %arg8: memref<32x64xf32, #tpu.memory_space<vmem>>, %arg9: memref<1x64xf32, #tpu.memory_space<vmem>>, %arg10: memref<32x64xf32, #tpu.memory_space<vmem>>, %arg11: memref<1x64xf32, #tpu.memory_space<vmem>>, %arg12: memref<1x1xf32, #tpu.memory_space<vmem>>, %arg13: memref<64x32xf32, #tpu.memory_space<vmem>>, %arg14: memref<1x32xf32, #tpu.memory_space<vmem>>, %arg15: memref<8x32xf32, #tpu.memory_space<vmem>>) attributes {dimension_semantics = [#tpu.dimension_semantics<parallel>], iteration_bounds = array<i64: 1>, scalar_prefetch = 0 : i64, scratch_operands = 0 : i64, tpu.core_type = #tpu.core_type<tc>, window_params = [{transform_indices = @transform_0, window_bounds = array<i64: 8, 16, 32>}, {transform_indices = @transform_1, window_bounds = array<i64: 8, 16, 32>}, {transform_indices = @transform_2, window_bounds = array<i64: 8, 32>}, {transform_indices = @transform_3, window_bounds = array<i64: 8, 16>}, {pipeline_mode = #tpu.pipeline_mode<synchronous>, transform_indices = @transform_4, window_bounds = array<i64: 32, 32>}, {pipeline_mode = #tpu.pipeline_mode<synchronous>, transform_indices = @transform_5, window_bounds = array<i64: 32, 32>}, {pipeline_mode = #tpu.pipeline_mode<synchronous>, transform_indices = @transform_6, window_bounds = array<i64: 1, 32>}, {pipeline_mode = #tpu.pipeline_mode<synchronous>, transform_indices = @transform_7, window_bounds = array<i64: 32, 64>}, {pipeline_mode = #tpu.pipeline_mode<synchronous>, transform_indices = @transform_8, window_bounds = array<i64: 1, 64>}, {pipeline_mode = #tpu.pipeline_mode<synchronous>, transform_indices = @transform_9, window_bounds = array<i64: 32, 64>}, {pipeline_mode = #tpu.pipeline_mode<synchronous>, transform_indices = @transform_10, window_bounds = array<i64: 1, 64>}, {pipeline_mode = #tpu.pipeline_mode<synchronous>, transform_indices = @transform_11, window_bounds = array<i64: 1, 1>}, {pipeline_mode = #tpu.pipeline_mode<synchronous>, transform_indices = @transform_12, window_bounds = array<i64: 64, 32>}, {pipeline_mode = #tpu.pipeline_mode<synchronous>, transform_indices = @transform_13, window_bounds = array<i64: 1, 32>}, {transform_indices = @transform_14, window_bounds = array<i64: 8, 32>}]} {
    %c0 = arith.constant 0 : index
    %c0_0 = arith.constant 0 : index
    %c0_1 = arith.constant 0 : index
    %0 = vector.load %arg1[%c0, %c0_0, %c0_1] : memref<8x16x32xf32, #tpu.memory_space<vmem>>, vector<8x16x32xf32>
    %1 = vector.shape_cast %0 : vector<8x16x32xf32> to vector<128x32xf32>
    %c0_2 = arith.constant 0 : index
    %c0_3 = arith.constant 0 : index
    %c0_4 = arith.constant 0 : index
    %2 = vector.load %arg2[%c0_2, %c0_3, %c0_4] : memref<8x16x32xf32, #tpu.memory_space<vmem>>, vector<8x16x32xf32>
    %3 = vector.shape_cast %2 : vector<8x16x32xf32> to vector<128x32xf32>
    %c0_5 = arith.constant 0 : index
    %c0_6 = arith.constant 0 : index
    %4 = vector.load %arg5[%c0_5, %c0_6] : memref<32x32xf32, #tpu.memory_space<vmem>>, vector<32x32xf32>
    %cst = arith.constant dense<0.000000e+00> : vector<128x32xf32>
    %5 = tpu.matmul %1, %4, %cst {dimension_numbers = #tpu.dot_dimension_numbers<[1], [0], [0], [1], [0, 0, 1, 1], [], []>} : vector<128x32xf32>, vector<32x32xf32>, vector<128x32xf32> -> vector<128x32xf32>
    %c0_7 = arith.constant 0 : index
    %c0_8 = arith.constant 0 : index
    %6 = vector.load %arg6[%c0_7, %c0_8] : memref<32x32xf32, #tpu.memory_space<vmem>>, vector<32x32xf32>
    %cst_9 = arith.constant dense<0.000000e+00> : vector<128x32xf32>
    %7 = tpu.matmul %3, %6, %cst_9 {dimension_numbers = #tpu.dot_dimension_numbers<[1], [0], [0], [1], [0, 0, 1, 1], [], []>} : vector<128x32xf32>, vector<32x32xf32>, vector<128x32xf32> -> vector<128x32xf32>
    %8 = arith.addf %5, %7 : vector<128x32xf32>
    %c0_10 = arith.constant 0 : index
    %c0_11 = arith.constant 0 : index
    %9 = vector.load %arg7[%c0_10, %c0_11] : memref<1x32xf32, #tpu.memory_space<vmem>>, vector<1x32xf32>
    %10 = vector.broadcast %9 : vector<1x32xf32> to vector<128x32xf32>
    %11 = arith.addf %8, %10 : vector<128x32xf32>
    %cst_12 = arith.constant 0.000000e+00 : f32
    %12 = vector.broadcast %cst_12 : f32 to vector<128x32xf32>
    %13 = arith.cmpf ogt, %11, %12 : vector<128x32xf32>
    %cst_13 = arith.constant 2.000000e-01 : f32
    %14 = vector.broadcast %cst_13 : f32 to vector<128x32xf32>
    %15 = arith.mulf %14, %11 : vector<128x32xf32>
    %16 = arith.select %13, %11, %15 : vector<128x32xi1>, vector<128x32xf32>
    %c0_14 = arith.constant 0 : index
    %c0_15 = arith.constant 0 : index
    %17 = vector.load %arg8[%c0_14, %c0_15] : memref<32x64xf32, #tpu.memory_space<vmem>>, vector<32x64xf32>
    %cst_16 = arith.constant dense<0.000000e+00> : vector<128x64xf32>
    %18 = tpu.matmul %16, %17, %cst_16 {dimension_numbers = #tpu.dot_dimension_numbers<[1], [0], [0], [1], [0, 0, 1, 1], [], []>} : vector<128x32xf32>, vector<32x64xf32>, vector<128x64xf32> -> vector<128x64xf32>
    %c0_17 = arith.constant 0 : index
    %c0_18 = arith.constant 0 : index
    %19 = vector.load %arg9[%c0_17, %c0_18] : memref<1x64xf32, #tpu.memory_space<vmem>>, vector<1x64xf32>
    %20 = vector.broadcast %19 : vector<1x64xf32> to vector<128x64xf32>
    %21 = arith.addf %18, %20 : vector<128x64xf32>
    %22 = vector.shape_cast %21 : vector<128x64xf32> to vector<8x16x64xf32>
    %c0_19 = arith.constant 0 : index
    %c0_20 = arith.constant 0 : index
    %23 = vector.load %arg3[%c0_19, %c0_20] : memref<8x32xf32, #tpu.memory_space<vmem>>, vector<8x32xf32>
    %c0_21 = arith.constant 0 : index
    %c0_22 = arith.constant 0 : index
    %24 = vector.load %arg10[%c0_21, %c0_22] : memref<32x64xf32, #tpu.memory_space<vmem>>, vector<32x64xf32>
    %cst_23 = arith.constant dense<0.000000e+00> : vector<8x64xf32>
    %25 = tpu.matmul %23, %24, %cst_23 {dimension_numbers = #tpu.dot_dimension_numbers<[1], [0], [0], [1], [0, 0, 1, 1], [], []>} : vector<8x32xf32>, vector<32x64xf32>, vector<8x64xf32> -> vector<8x64xf32>
    %26 = vector.shape_cast %25 : vector<8x64xf32> to vector<8x1x64xf32>
    %27 = vector.broadcast %26 : vector<8x1x64xf32> to vector<8x16x64xf32>
    %28 = arith.addf %22, %27 : vector<8x16x64xf32>
    %cst_24 = arith.constant 0.000000e+00 : f32
    %29 = vector.broadcast %cst_24 : f32 to vector<8x16x64xf32>
    %30 = arith.cmpf ogt, %28, %29 : vector<8x16x64xf32>
    %cst_25 = arith.constant 2.000000e-01 : f32
    %31 = vector.broadcast %cst_25 : f32 to vector<8x16x64xf32>
    %32 = arith.mulf %31, %28 : vector<8x16x64xf32>
    %33 = arith.select %30, %28, %32 : vector<8x16x64xi1>, vector<8x16x64xf32>
    %c0_26 = arith.constant 0 : index
    %c0_27 = arith.constant 0 : index
    %34 = vector.load %arg11[%c0_26, %c0_27] : memref<1x64xf32, #tpu.memory_space<vmem>>, vector<1x64xf32>
    %35 = vector.shape_cast %34 : vector<1x64xf32> to vector<1x1x64xf32>
    %36 = vector.broadcast %35 : vector<1x1x64xf32> to vector<8x16x64xf32>
    %37 = arith.mulf %33, %36 : vector<8x16x64xf32>
    %cst_28 = arith.constant dense<0.000000e+00> : vector<8x16xf32>
    %38 = vector.multi_reduction <add>, %37, %cst_28 [2] : vector<8x16x64xf32> to vector<8x16xf32>
    %c0_29 = arith.constant 0 : index
    %c0_30 = arith.constant 0 : index
    %39 = vector.load %arg12[%c0_29, %c0_30] : memref<1x1xf32, #tpu.memory_space<vmem>>, vector<1x1xf32>
    %40 = vector.broadcast %39 : vector<1x1xf32> to vector<8x16xf32>
    %41 = arith.addf %38, %40 : vector<8x16xf32>
    %42 = math.exp %41 : vector<8x16xf32>
    %c0_31 = arith.constant 0 : index
    %c0_32 = arith.constant 0 : index
    %43 = vector.load %arg4[%c0_31, %c0_32] : memref<8x16xf32, #tpu.memory_space<vmem>>, vector<8x16xf32>
    %44 = arith.mulf %42, %43 : vector<8x16xf32>
    %cst_33 = arith.constant dense<0.000000e+00> : vector<8xf32>
    %45 = vector.multi_reduction <add>, %44, %cst_33 [1] : vector<8x16xf32> to vector<8xf32>
    %46 = vector.shape_cast %45 : vector<8xf32> to vector<8x1xf32>
    %cst_34 = arith.constant 1.000000e-10 : f32
    %47 = vector.broadcast %cst_34 : f32 to vector<8x1xf32>
    %48 = arith.addf %46, %47 : vector<8x1xf32>
    %49 = vector.broadcast %48 : vector<8x1xf32> to vector<8x16xf32>
    %50 = arith.divf %44, %49 : vector<8x16xf32>
    %51 = vector.shape_cast %50 : vector<8x16xf32> to vector<8x16x1xf32>
    %52 = vector.broadcast %51 : vector<8x16x1xf32> to vector<8x16x64xf32>
    %53 = arith.mulf %52, %22 : vector<8x16x64xf32>
    %cst_35 = arith.constant dense<0.000000e+00> : vector<8x64xf32>
    %54 = vector.multi_reduction <add>, %53, %cst_35 [1] : vector<8x16x64xf32> to vector<8x64xf32>
    %c0_36 = arith.constant 0 : index
    %c0_37 = arith.constant 0 : index
    %55 = vector.load %arg13[%c0_36, %c0_37] : memref<64x32xf32, #tpu.memory_space<vmem>>, vector<64x32xf32>
    %cst_38 = arith.constant dense<0.000000e+00> : vector<8x32xf32>
    %56 = tpu.matmul %54, %55, %cst_38 {dimension_numbers = #tpu.dot_dimension_numbers<[1], [0], [0], [1], [0, 0, 1, 1], [], []>} : vector<8x64xf32>, vector<64x32xf32>, vector<8x32xf32> -> vector<8x32xf32>
    %c0_39 = arith.constant 0 : index
    %c0_40 = arith.constant 0 : index
    %57 = vector.load %arg14[%c0_39, %c0_40] : memref<1x32xf32, #tpu.memory_space<vmem>>, vector<1x32xf32>
    %58 = vector.broadcast %57 : vector<1x32xf32> to vector<8x32xf32>
    %59 = arith.addf %56, %58 : vector<8x32xf32>
    %cst_41 = arith.constant 0.000000e+00 : f32
    %60 = vector.broadcast %cst_41 : f32 to vector<8x32xf32>
    %61 = arith.maximumf %59, %60 : vector<8x32xf32>
    %c0_42 = arith.constant 0 : index
    %c0_43 = arith.constant 0 : index
    %62 = vector.load %arg15[%c0_42, %c0_43] : memref<8x32xf32, #tpu.memory_space<vmem>>, vector<8x32xf32>
    tpu.vector_store %arg15[%c0_42, %c0_43], %61 {strides = array<i32>} : memref<8x32xf32, #tpu.memory_space<vmem>>, vector<8x32xf32>,
    return
  }
  func.func @transform_0(%arg0: i32) -> (i32, i32, i32) {
    %c0_i32 = arith.constant 0 : i32
    %c0_i32_0 = arith.constant 0 : i32
    %c0_i32_1 = arith.constant 0 : i32
    return %arg0, %c0_i32, %c0_i32_0 : i32, i32, i32
  }
  func.func @transform_1(%arg0: i32) -> (i32, i32, i32) {
    %c0_i32 = arith.constant 0 : i32
    %c0_i32_0 = arith.constant 0 : i32
    %c0_i32_1 = arith.constant 0 : i32
    return %arg0, %c0_i32, %c0_i32_0 : i32, i32, i32
  }
  func.func @transform_2(%arg0: i32) -> (i32, i32) {
    %c0_i32 = arith.constant 0 : i32
    %c0_i32_0 = arith.constant 0 : i32
    return %arg0, %c0_i32 : i32, i32
  }
  func.func @transform_3(%arg0: i32) -> (i32, i32) {
    %c0_i32 = arith.constant 0 : i32
    %c0_i32_0 = arith.constant 0 : i32
    return %arg0, %c0_i32 : i32, i32
  }
  func.func @transform_4(%arg0: i32) -> (i32, i32) {
    %c0_i32 = arith.constant 0 : i32
    %c0_i32_0 = arith.constant 0 : i32
    %c0_i32_1 = arith.constant 0 : i32
    return %c0_i32, %c0_i32_0 : i32, i32
  }
  func.func @transform_5(%arg0: i32) -> (i32, i32) {
    %c0_i32 = arith.constant 0 : i32
    %c0_i32_0 = arith.constant 0 : i32
    %c0_i32_1 = arith.constant 0 : i32
    return %c0_i32, %c0_i32_0 : i32, i32
  }
  func.func @transform_6(%arg0: i32) -> (i32, i32) {
    %c0_i32 = arith.constant 0 : i32
    %c0_i32_0 = arith.constant 0 : i32
    %c0_i32_1 = arith.constant 0 : i32
    return %c0_i32, %c0_i32_0 : i32, i32
  }
  func.func @transform_7(%arg0: i32) -> (i32, i32) {
    %c0_i32 = arith.constant 0 : i32
    %c0_i32_0 = arith.constant 0 : i32
    %c0_i32_1 = arith.constant 0 : i32
    return %c0_i32, %c0_i32_0 : i32, i32
  }
  func.func @transform_8(%arg0: i32) -> (i32, i32) {
    %c0_i32 = arith.constant 0 : i32
    %c0_i32_0 = arith.constant 0 : i32
    %c0_i32_1 = arith.constant 0 : i32
    return %c0_i32, %c0_i32_0 : i32, i32
  }
  func.func @transform_9(%arg0: i32) -> (i32, i32) {
    %c0_i32 = arith.constant 0 : i32
    %c0_i32_0 = arith.constant 0 : i32
    %c0_i32_1 = arith.constant 0 : i32
    return %c0_i32, %c0_i32_0 : i32, i32
  }
  func.func @transform_10(%arg0: i32) -> (i32, i32) {
    %c0_i32 = arith.constant 0 : i32
    %c0_i32_0 = arith.constant 0 : i32
    %c0_i32_1 = arith.constant 0 : i32
    return %c0_i32, %c0_i32_0 : i32, i32
  }
  func.func @transform_11(%arg0: i32) -> (i32, i32) {
    %c0_i32 = arith.constant 0 : i32
    %c0_i32_0 = arith.constant 0 : i32
    %c0_i32_1 = arith.constant 0 : i32
    return %c0_i32, %c0_i32_0 : i32, i32
  }
  func.func @transform_12(%arg0: i32) -> (i32, i32) {
    %c0_i32 = arith.constant 0 : i32
    %c0_i32_0 = arith.constant 0 : i32
    %c0_i32_1 = arith.constant 0 : i32
    return %c0_i32, %c0_i32_0 : i32, i32
  }
  func.func @transform_13(%arg0: i32) -> (i32, i32) {
    %c0_i32 = arith.constant 0 : i32
    %c0_i32_0 = arith.constant 0 : i32
    %c0_i32_1 = arith.constant 0 : i32
    return %c0_i32, %c0_i32_0 : i32, i32
  }
  func.func @transform_14(%arg0: i32) -> (i32, i32) {
    %c0_i32 = arith.constant 0 : i32
    %c0_i32_0 = arith.constant 0 : i32
    return %arg0, %c0_i32 : i32, i32
  }
}

</mosaic_0001>

<llo_original>
// kernel: tpu_custom_call.1
$region0: #{tpu_custom_call.1}
  #allocation0 [shape = 'u32[]', space=smem, size = 0x4, offset = 0x4, fixed_abs, tag = 'smem constant byte address 0x4 - core index']
  #allocation1 [shape = 'u32[72,128]{1,0:T(1,128)}', space=vmem, size = 0x9000, scoped, tag = 'internal scratch']
  #allocation2 [shape = 'f32[1,1]{1,0:T(1,128)S(1)}', space=vmem, size = 0x200, scoped, tag = 'scoped memory for tpu_custom_call.1']
  %s0 = inlined_call_operand.hbm [shape: f32[8,16,32], index: 0, kind: input, shape index: {}]
  %s1 = inlined_call_operand.hbm [shape: f32[8,16,32], index: 1, kind: input, shape index: {}]
  %s2 = inlined_call_operand.hbm [shape: f32[8,32], index: 2, kind: input, shape index: {}]
  %s3 = inlined_call_operand.hbm [shape: f32[8,16], index: 3, kind: input, shape index: {}]
  %s4 = inlined_call_operand.vmem [shape: f32[32,32], index: 4, kind: input, shape index: {}]
  %s5 = inlined_call_operand.vmem [shape: f32[32,32], index: 5, kind: input, shape index: {}]
  %s6 = inlined_call_operand.vmem [shape: f32[1,32], index: 6, kind: input, shape index: {}]
  %s7 = inlined_call_operand.vmem [shape: f32[32,64], index: 7, kind: input, shape index: {}]
  %s8 = inlined_call_operand.vmem [shape: f32[1,64], index: 8, kind: input, shape index: {}]
  %s9 = inlined_call_operand.hbm [shape: f32[32,64], index: 9, kind: input, shape index: {}]
  %s10 = inlined_call_operand.vmem [shape: f32[1,64], index: 10, kind: input, shape index: {}]
  %s11 = inlined_call_operand.<no memory space> [shape: f32[1,1], index: 11, kind: input, shape index: {}]
  %s12 = inlined_call_operand.vmem [shape: f32[64,32], index: 12, kind: input, shape index: {}]
  %s13 = inlined_call_operand.vmem [shape: f32[1,32], index: 13, kind: input, shape index: {}]
  %s14 = inlined_call_operand.hbm [shape: f32[8,32], index: 14, kind: output, shape index: {}]
  %s15 = sld [smem:[#allocation0]]
  $region86: #{tpu_custom_call.1} parent=0
    _
  %s17 = ssub.s32 1, %s15
  %s18 = scalar_select 0, %s17, %s15
  %v19 = vstv %s11
  %20 = vst [vmem:[#allocation2] sm:$0x1] %v19
  $region1: #{tpu_custom_call.1} parent=0
    #allocation3 [shape = 'u8[65536]{0}', space=vmem, size = 0x10000, scoped, tag = 'input window, operand 0, single buffered']
    #allocation4 [shape = 's32[1]{0}', space=sflag, size = 0x4, scoped, tag = 'scoped memory for tpu_custom_call.1']
    #allocation5 [shape = 's32[1]{0}', space=sflag, size = 0x4, scoped, tag = 'scoped memory for tpu_custom_call.1']
    #allocation6 [shape = 'u8[65536]{0}', space=vmem, size = 0x10000, scoped, tag = 'input window, operand 1, single buffered']
    #allocation7 [shape = 's32[1]{0}', space=sflag, size = 0x4, scoped, tag = 'scoped memory for tpu_custom_call.1']
    #allocation8 [shape = 'u8[4096]{0}', space=vmem, size = 0x1000, scoped, tag = 'input window, operand 2, single buffered']
    #allocation9 [shape = 'u8[4096]{0}', space=vmem, size = 0x1000, scoped, tag = 'input window, operand 3, single buffered']
    #allocation10 [shape = 's32[1]{0}', space=sflag, size = 0x4, scoped, tag = 'scoped memory for tpu_custom_call.1']
    #allocation11 [shape = 'u8[16384]{0}', space=vmem, size = 0x4000, scoped, tag = 'input window, operand 9, single buffered']
    #allocation12 [shape = 'u8[4096]{0}', space=vmem, size = 0x1000, scoped, tag = 'output window, operand 0, single buffered']
    %21 = vsyncpa [#allocation4], 0
    %22 = vsyncpa [#allocation7], 0
    %23 = vsyncpa [#allocation10], 0
    %24 = vsyncpa [#allocation5], 0
    // Predicated region
    $region2: #{tpu_custom_call.1} parent=1 // pred_check
      _
    $region3: #{tpu_custom_call.1} parent=1 // pred_check_branch
      %26 = sbr.rel (0) target = $region5
    $region4: #{tpu_custom_call.1} parent=1 // pred_region
      %28 = vsyncadd [#allocation4], 0
      %s29 = sshll.u32 %s0, 4
      %s30 = int_to_ptr.hbm [resolvable:$true] %s29
      %s31 = sshll.u32 [#allocation3], 4
      %s32 = int_to_ptr.vmem [resolvable:$true] %s31
      %37 = dma.hbm_to_vmem [thread:$0]  %s30, 2048, %s32, [#allocation4], 128, 128, 8
    $region5: #{tpu_custom_call.1} parent=1 // pred_fallthru
      _
    // Predicated region
    $region6: #{tpu_custom_call.1} parent=1 // pred_check
      _
    $region7: #{tpu_custom_call.1} parent=1 // pred_check_branch
      %39 = sbr.rel (0) target = $region9
    $region8: #{tpu_custom_call.1} parent=1 // pred_region
      %41 = vsyncadd [#allocation7], 0
      %s42 = sshll.u32 %s1, 4
      %s43 = int_to_ptr.hbm [resolvable:$true] %s42
      %s44 = sshll.u32 [#allocation6], 4
      %s45 = int_to_ptr.vmem [resolvable:$true] %s44
      %50 = dma.hbm_to_vmem [thread:$0]  %s43, 2048, %s45, [#allocation7], 128, 128, 8
    $region9: #{tpu_custom_call.1} parent=1 // pred_fallthru
      _
    // Predicated region
    $region10: #{tpu_custom_call.1} parent=1 // pred_check
      _
    $region11: #{tpu_custom_call.1} parent=1 // pred_check_branch
      %52 = sbr.rel (0) target = $region13
    $region12: #{tpu_custom_call.1} parent=1 // pred_region
      %54 = vsyncadd [#allocation7], 0
      %s56 = sshll.u32 %s2, 4
      %s57 = int_to_ptr.hbm [resolvable:$true] %s56
      %s58 = sshll.u32 [#allocation8], 4
      %s59 = int_to_ptr.vmem [resolvable:$true] %s58
      %61 = dma.hbm_to_vmem [thread:$0]  %s57, 128, %s59, [#allocation7]
    $region13: #{tpu_custom_call.1} parent=1 // pred_fallthru
      _
    // Predicated region
    $region14: #{tpu_custom_call.1} parent=1 // pred_check
      _
    $region15: #{tpu_custom_call.1} parent=1 // pred_check_branch
      %63 = sbr.rel (0) target = $region17
    $region16: #{tpu_custom_call.1} parent=1 // pred_region
      %65 = vsyncadd [#allocation10], 0
      %s67 = sshll.u32 %s3, 4
      %s68 = int_to_ptr.hbm [resolvable:$true] %s67
      %s69 = sshll.u32 [#allocation9], 4
      %s70 = int_to_ptr.vmem [resolvable:$true] %s69
      %72 = dma.hbm_to_vmem [thread:$0]  %s68, 128, %s70, [#allocation10]
    $region17: #{tpu_custom_call.1} parent=1 // pred_fallthru
      _
    // Predicated region
    $region18: #{tpu_custom_call.1} parent=1 // pred_check
      _
    $region19: #{tpu_custom_call.1} parent=1 // pred_check_branch
      %74 = sbr.rel (0) target = $region21
    $region20: #{tpu_custom_call.1} parent=1 // pred_region
      _
    $region21: #{tpu_custom_call.1} parent=1 // pred_fallthru
      _
    // Predicated region
    $region22: #{tpu_custom_call.1} parent=1 // pred_check
      _
    $region23: #{tpu_custom_call.1} parent=1 // pred_check_branch
      %76 = sbr.rel (0) target = $region25
    $region24: #{tpu_custom_call.1} parent=1 // pred_region
      _
    $region25: #{tpu_custom_call.1} parent=1 // pred_fallthru
      _
    // Predicated region
    $region26: #{tpu_custom_call.1} parent=1 // pred_check
      _
    $region27: #{tpu_custom_call.1} parent=1 // pred_check_branch
      %78 = sbr.rel (0) target = $region29
    $region28: #{tpu_custom_call.1} parent=1 // pred_region
      _
    $region29: #{tpu_custom_call.1} parent=1 // pred_fallthru
      _
    // Predicated region
    $region30: #{tpu_custom_call.1} parent=1 // pred_check
      _
    $region31: #{tpu_custom_call.1} parent=1 // pred_check_branch
      %80 = sbr.rel (0) target = $region33
    $region32: #{tpu_custom_call.1} parent=1 // pred_region
      _
    $region33: #{tpu_custom_call.1} parent=1 // pred_fallthru
      _
    // Predicated region
    $region34: #{tpu_custom_call.1} parent=1 // pred_check
      _
    $region35: #{tpu_custom_call.1} parent=1 // pred_check_branch
      %82 = sbr.rel (0) target = $region37
    $region36: #{tpu_custom_call.1} parent=1 // pred_region
      _
    $region37: #{tpu_custom_call.1} parent=1 // pred_fallthru
      _
    // Predicated region
    $region38: #{tpu_custom_call.1} parent=1 // pred_check
      _
    $region39: #{tpu_custom_call.1} parent=1 // pred_check_branch
      %84 = sbr.rel (0) target = $region41
    $region40: #{tpu_custom_call.1} parent=1 // pred_region
      %86 = vsyncadd [#allocation10], 0
      %s87 = sshll.u32 %s9, 4
      %s88 = int_to_ptr.hbm [resolvable:$true] %s87
      %s89 = sshll.u32 [#allocation11], 4
      %s90 = int_to_ptr.vmem [resolvable:$true] %s89
      %95 = dma.hbm_to_vmem [thread:$0]  %s88, 512, %s90, [#allocation10], 128, 128, 8
    $region41: #{tpu_custom_call.1} parent=1 // pred_fallthru
      _
    // Predicated region
    $region42: #{tpu_custom_call.1} parent=1 // pred_check
      _
    $region43: #{tpu_custom_call.1} parent=1 // pred_check_branch
      %97 = sbr.rel (0) target = $region45
    $region44: #{tpu_custom_call.1} parent=1 // pred_region
      _
    $region45: #{tpu_custom_call.1} parent=1 // pred_fallthru
      _
    // Predicated region
    $region46: #{tpu_custom_call.1} parent=1 // pred_check
      _
    $region47: #{tpu_custom_call.1} parent=1 // pred_check_branch
      %99 = sbr.rel (0) target = $region49
    $region48: #{tpu_custom_call.1} parent=1 // pred_region
      _
    $region49: #{tpu_custom_call.1} parent=1 // pred_fallthru
      _
    // Predicated region
    $region50: #{tpu_custom_call.1} parent=1 // pred_check
      _
    $region51: #{tpu_custom_call.1} parent=1 // pred_check_branch
      %101 = sbr.rel (0) target = $region53
    $region52: #{tpu_custom_call.1} parent=1 // pred_region
      _
    $region53: #{tpu_custom_call.1} parent=1 // pred_fallthru
      _
    // Predicated region
    $region54: #{tpu_custom_call.1} parent=1 // pred_check
      _
    $region55: #{tpu_custom_call.1} parent=1 // pred_check_branch
      %103 = sbr.rel (0) target = $region57
    $region56: #{tpu_custom_call.1} parent=1 // pred_region
      _
    $region57: #{tpu_custom_call.1} parent=1 // pred_fallthru
      _
    // Predicated region
    $region58: #{tpu_custom_call.1} parent=1 // pred_check
      _
    $region59: #{tpu_custom_call.1} parent=1 // pred_check_branch
      %105 = sbr.rel (0) target = $region61
    $region60: #{tpu_custom_call.1} parent=1 // pred_region
      %107 = dma.done [#allocation4], 2048
    $region61: #{tpu_custom_call.1} parent=1 // pred_fallthru
      _
    // Predicated region
    $region62: #{tpu_custom_call.1} parent=1 // pred_check
      _
    $region63: #{tpu_custom_call.1} parent=1 // pred_check_branch
      %109 = sbr.rel (0) target = $region65
    $region64: #{tpu_custom_call.1} parent=1 // pred_region
      %111 = dma.done [#allocation7], 2048
    $region65: #{tpu_custom_call.1} parent=1 // pred_fallthru
      _
    // Predicated region
    $region66: #{tpu_custom_call.1} parent=1 // pred_check
      _
    $region67: #{tpu_custom_call.1} parent=1 // pred_check_branch
      %113 = sbr.rel (0) target = $region69
    $region68: #{tpu_custom_call.1} parent=1 // pred_region
      %115 = dma.done [#allocation7], 128
    $region69: #{tpu_custom_call.1} parent=1 // pred_fallthru
      _
    // Predicated region
    $region70: #{tpu_custom_call.1} parent=1 // pred_check
      _
    $region71: #{tpu_custom_call.1} parent=1 // pred_check_branch
      %117 = sbr.rel (0) target = $region73
    $region72: #{tpu_custom_call.1} parent=1 // pred_region
      %119 = dma.done [#allocation10], 128
    $region73: #{tpu_custom_call.1} parent=1 // pred_fallthru
      _
    // Predicated region
    $region74: #{tpu_custom_call.1} parent=1 // pred_check
      _
    $region75: #{tpu_custom_call.1} parent=1 // pred_check_branch
      %121 = sbr.rel (0) target = $region77
    $region76: #{tpu_custom_call.1} parent=1 // pred_region
      %123 = dma.done [#allocation10], 512
    $region77: #{tpu_custom_call.1} parent=1 // pred_fallthru
      _
    %v124 = vld [vmem:[#allocation3] sm:$0xff]
    %v125 = vld [vmem:[#allocation3 + $0x8] sm:$0xff]
    %v126 = vld [vmem:[#allocation3 + $0x10] sm:$0xff]
    %v127 = vld [vmem:[#allocation3 + $0x18] sm:$0xff]
    %v128 = vld [vmem:[#allocation3 + $0x20] sm:$0xff]
    %v129 = vld [vmem:[#allocation3 + $0x28] sm:$0xff]
    %v130 = vld [vmem:[#allocation3 + $0x30] sm:$0xff]
    %v131 = vld [vmem:[#allocation3 + $0x38] sm:$0xff]
    %v132 = vld [vmem:[#allocation3 + $0x40] sm:$0xff]
    %v133 = vld [vmem:[#allocation3 + $0x48] sm:$0xff]
    %v134 = vld [vmem:[#allocation3 + $0x50] sm:$0xff]
    %v135 = vld [vmem:[#allocation3 + $0x58] sm:$0xff]
    %v136 = vld [vmem:[#allocation3 + $0x60] sm:$0xff]
    %v137 = vld [vmem:[#allocation3 + $0x68] sm:$0xff]
    %v138 = vld [vmem:[#allocation3 + $0x70] sm:$0xff]
    %v139 = vld [vmem:[#allocation3 + $0x78] sm:$0xff]
    %v140 = vld [vmem:[#allocation6] sm:$0xff]
    %v141 = vld [vmem:[#allocation6 + $0x8] sm:$0xff]
    %v142 = vld [vmem:[#allocation6 + $0x10] sm:$0xff]
    %v143 = vld [vmem:[#allocation6 + $0x18] sm:$0xff]
    %v144 = vld [vmem:[#allocation6 + $0x20] sm:$0xff]
    %v145 = vld [vmem:[#allocation6 + $0x28] sm:$0xff]
    %v146 = vld [vmem:[#allocation6 + $0x30] sm:$0xff]
    %v147 = vld [vmem:[#allocation6 + $0x38] sm:$0xff]
    %v148 = vld [vmem:[#allocation6 + $0x40] sm:$0xff]
    %v149 = vld [vmem:[#allocation6 + $0x48] sm:$0xff]
    %v150 = vld [vmem:[#allocation6 + $0x50] sm:$0xff]
    %v151 = vld [vmem:[#allocation6 + $0x58] sm:$0xff]
    %v152 = vld [vmem:[#allocation6 + $0x60] sm:$0xff]
    %v153 = vld [vmem:[#allocation6 + $0x68] sm:$0xff]
    %v154 = vld [vmem:[#allocation6 + $0x70] sm:$0xff]
    %v155 = vld [vmem:[#allocation6 + $0x78] sm:$0xff]
    %v156 = vld [vmem:[%s4] sm:$0xff]
    %v157 = vld [vmem:[%s4 + $0x8] sm:$0xff]
    %v158 = vld [vmem:[%s4 + $0x10] sm:$0xff]
    %v159 = vld [vmem:[%s4 + $0x18] sm:$0xff]
    %v160 = vld [vmem:[%s5] sm:$0xff]
    %v161 = vld [vmem:[%s5 + $0x8] sm:$0xff]
    %v162 = vld [vmem:[%s5 + $0x10] sm:$0xff]
    %v163 = vld [vmem:[%s5 + $0x18] sm:$0xff]
    %vm164 = vcmask 261120
    %v166 = vsel %vm164, %v140, 0
    %v169 = vsel %vm164, %v141, 0
    %v172 = vsel %vm164, %v142, 0
    %v175 = vsel %vm164, %v143, 0
    %v178 = vsel %vm164, %v144, 0
    %v181 = vsel %vm164, %v145, 0
    %v184 = vsel %vm164, %v146, 0
    %v187 = vsel %vm164, %v147, 0
    %v190 = vsel %vm164, %v148, 0
    %v193 = vsel %vm164, %v149, 0
    %v196 = vsel %vm164, %v150, 0
    %v199 = vsel %vm164, %v151, 0
    %v202 = vsel %vm164, %v152, 0
    %v205 = vsel %vm164, %v153, 0
    %v208 = vsel %vm164, %v154, 0
    %v211 = vsel %vm164, %v155, 0
    %213 = vmatpush.msra.mxu0 0.0
    %214 = vmatpush.msra.mxu0 0.0
    %215 = vmatpush.msra.mxu0 0.0
    %216 = vmatpush.msra.mxu0 0.0
    %217 = vmatpush.msra.mxu0 0.0
    %218 = vmatpush.msra.mxu0 0.0
    %219 = vmatpush.msra.mxu0 0.0
    %220 = vmatpush.msra.mxu0 0.0
    %221 = vmatpush.msra.mxu0 0.0
    %222 = vmatpush.msra.mxu0 0.0
    %223 = vmatpush.msra.mxu0 0.0
    %224 = vmatpush.msra.mxu0 0.0
    %225 = vmatpush.msra.mxu0 %v163
    %226 = vmatpush.msra.mxu0 %v162
    %227 = vmatpush.msra.mxu0 %v161
    %228 = vmatpush.msra.mxu0 %v160
    %229 = vmatmul.f32.gmra.mxu0 %v166
    %v230 = vpop.f32.mrf.mxu0
    %v231 = vadd.f32 0.0, %v230
    %232 = vmatmul.f32.gmra.mxu0 %v169
    %v233 = vpop.f32.mrf.mxu0
    %v234 = vadd.f32 0.0, %v233
    %235 = vmatmul.f32.gmra.mxu0 %v172
    %v236 = vpop.f32.mrf.mxu0
    %v237 = vadd.f32 0.0, %v236
    %238 = vmatmul.f32.gmra.mxu0 %v175
    %v239 = vpop.f32.mrf.mxu0
    %v240 = vadd.f32 0.0, %v239
    %241 = vmatmul.f32.gmra.mxu0 %v178
    %v242 = vpop.f32.mrf.mxu0
    %v243 = vadd.f32 0.0, %v242
    %244 = vmatmul.f32.gmra.mxu0 %v181
    %v245 = vpop.f32.mrf.mxu0
    %v246 = vadd.f32 0.0, %v245
    %247 = vmatmul.f32.gmra.mxu0 %v184
    %v248 = vpop.f32.mrf.mxu0
    %v249 = vadd.f32 0.0, %v248
    %250 = vmatmul.f32.gmra.mxu0 %v187
    %v251 = vpop.f32.mrf.mxu0
    %v252 = vadd.f32 0.0, %v251
    %253 = vmatmul.f32.gmra.mxu0 %v190
    %v254 = vpop.f32.mrf.mxu0
    %v255 = vadd.f32 0.0, %v254
    %256 = vmatmul.f32.gmra.mxu0 %v193
    %v257 = vpop.f32.mrf.mxu0
    %v258 = vadd.f32 0.0, %v257
    %259 = vmatmul.f32.gmra.mxu0 %v196
    %v260 = vpop.f32.mrf.mxu0
    %v261 = vadd.f32 0.0, %v260
    %262 = vmatmul.f32.gmra.mxu0 %v199
    %v263 = vpop.f32.mrf.mxu0
    %v264 = vadd.f32 0.0, %v263
    %265 = vmatmul.f32.gmra.mxu0 %v202
    %v266 = vpop.f32.mrf.mxu0
    %v267 = vadd.f32 0.0, %v266
    %268 = vmatmul.f32.gmra.mxu0 %v205
    %v269 = vpop.f32.mrf.mxu0
    %v270 = vadd.f32 0.0, %v269
    %271 = vmatmul.f32.gmra.mxu0 %v208
    %v272 = vpop.f32.mrf.mxu0
    %v273 = vadd.f32 0.0, %v272
    %274 = vmatmul.f32.gmra.mxu0 %v211
    %v275 = vpop.f32.mrf.mxu0
    %v276 = vadd.f32 0.0, %v275
    %277 = vdwg.mxu0
    %v279 = vsel %vm164, %v124, 0
    %v282 = vsel %vm164, %v125, 0
    %v285 = vsel %vm164, %v126, 0
    %v288 = vsel %vm164, %v127, 0
    %v291 = vsel %vm164, %v128, 0
    %v294 = vsel %vm164, %v129, 0
    %v297 = vsel %vm164, %v130, 0
    %v300 = vsel %vm164, %v131, 0
    %v303 = vsel %vm164, %v132, 0
    %v306 = vsel %vm164, %v133, 0
    %v309 = vsel %vm164, %v134, 0
    %v312 = vsel %vm164, %v135, 0
    %v315 = vsel %vm164, %v136, 0
    %v318 = vsel %vm164, %v137, 0
    %v321 = vsel %vm164, %v138, 0
    %v324 = vsel %vm164, %v139, 0
    %326 = vmatpush.msra.mxu0 0.0
    %327 = vmatpush.msra.mxu0 0.0
    %328 = vmatpush.msra.mxu0 0.0
    %329 = vmatpush.msra.mxu0 0.0
    %330 = vmatpush.msra.mxu0 0.0
    %331 = vmatpush.msra.mxu0 0.0
    %332 = vmatpush.msra.mxu0 0.0
    %333 = vmatpush.msra.mxu0 0.0
    %334 = vmatpush.msra.mxu0 0.0
    %335 = vmatpush.msra.mxu0 0.0
    %336 = vmatpush.msra.mxu0 0.0
    %337 = vmatpush.msra.mxu0 0.0
    %338 = vmatpush.msra.mxu0 %v159
    %339 = vmatpush.msra.mxu0 %v158
    %340 = vmatpush.msra.mxu0 %v157
    %341 = vmatpush.msra.mxu0 %v156
    %342 = vmatmul.f32.gmra.mxu0 %v279
    %v343 = vpop.f32.mrf.mxu0
    %v344 = vadd.f32 %v231, %v343
    %345 = vmatmul.f32.gmra.mxu0 %v282
    %v346 = vpop.f32.mrf.mxu0
    %v347 = vadd.f32 %v234, %v346
    %348 = vmatmul.f32.gmra.mxu0 %v285
    %v349 = vpop.f32.mrf.mxu0
    %v350 = vadd.f32 %v237, %v349
    %351 = vmatmul.f32.gmra.mxu0 %v288
    %v352 = vpop.f32.mrf.mxu0
    %v353 = vadd.f32 %v240, %v352
    %354 = vmatmul.f32.gmra.mxu0 %v291
    %v355 = vpop.f32.mrf.mxu0
    %v356 = vadd.f32 %v243, %v355
    %357 = vmatmul.f32.gmra.mxu0 %v294
    %v358 = vpop.f32.mrf.mxu0
    %v359 = vadd.f32 %v246, %v358
    %360 = vmatmul.f32.gmra.mxu0 %v297
    %v361 = vpop.f32.mrf.mxu0
    %v362 = vadd.f32 %v249, %v361
    %363 = vmatmul.f32.gmra.mxu0 %v300
    %v364 = vpop.f32.mrf.mxu0
    %v365 = vadd.f32 %v252, %v364
    %366 = vmatmul.f32.gmra.mxu0 %v303
    %v367 = vpop.f32.mrf.mxu0
    %v368 = vadd.f32 %v255, %v367
    %369 = vmatmul.f32.gmra.mxu0 %v306
    %v370 = vpop.f32.mrf.mxu0
    %v371 = vadd.f32 %v258, %v370
    %372 = vmatmul.f32.gmra.mxu0 %v309
    %v373 = vpop.f32.mrf.mxu0
    %v374 = vadd.f32 %v261, %v373
    %375 = vmatmul.f32.gmra.mxu0 %v312
    %v376 = vpop.f32.mrf.mxu0
    %v377 = vadd.f32 %v264, %v376
    %378 = vmatmul.f32.gmra.mxu0 %v315
    %v379 = vpop.f32.mrf.mxu0
    %v380 = vadd.f32 %v267, %v379
    %381 = vmatmul.f32.gmra.mxu0 %v318
    %v382 = vpop.f32.mrf.mxu0
    %v383 = vadd.f32 %v270, %v382
    %384 = vmatmul.f32.gmra.mxu0 %v321
    %v385 = vpop.f32.mrf.mxu0
    %v386 = vadd.f32 %v273, %v385
    %387 = vmatmul.f32.gmra.mxu0 %v324
    %v388 = vpop.f32.mrf.mxu0
    %v389 = vadd.f32 %v276, %v388
    %390 = vdwg.mxu0
    %v391 = vld [vmem:[%s6] sm:$0x1]
    %v393 = vperm.slane %v391, 0
    %v395 = vadd.f32 %v344, %v393
    %v396 = vadd.f32 %v347, %v393
    %v397 = vadd.f32 %v350, %v393
    %v398 = vadd.f32 %v353, %v393
    %v399 = vadd.f32 %v356, %v393
    %v400 = vadd.f32 %v359, %v393
    %v401 = vadd.f32 %v362, %v393
    %v402 = vadd.f32 %v365, %v393
    %v403 = vadd.f32 %v368, %v393
    %v404 = vadd.f32 %v371, %v393
    %v405 = vadd.f32 %v374, %v393
    %v406 = vadd.f32 %v377, %v393
    %v407 = vadd.f32 %v380, %v393
    %v408 = vadd.f32 %v383, %v393
    %v409 = vadd.f32 %v386, %v393
    %v410 = vadd.f32 %v389, %v393
    %vm411 = vcmp.gt.f32.partialorder %v395, 0.0
    %vm412 = vcmp.gt.f32.partialorder %v396, 0.0
    %vm413 = vcmp.gt.f32.partialorder %v397, 0.0
    %vm414 = vcmp.gt.f32.partialorder %v398, 0.0
    %vm415 = vcmp.gt.f32.partialorder %v399, 0.0
    %vm416 = vcmp.gt.f32.partialorder %v400, 0.0
    %vm417 = vcmp.gt.f32.partialorder %v401, 0.0
    %vm418 = vcmp.gt.f32.partialorder %v402, 0.0
    %vm419 = vcmp.gt.f32.partialorder %v403, 0.0
    %vm420 = vcmp.gt.f32.partialorder %v404, 0.0
    %vm421 = vcmp.gt.f32.partialorder %v405, 0.0
    %vm422 = vcmp.gt.f32.partialorder %v406, 0.0
    %vm423 = vcmp.gt.f32.partialorder %v407, 0.0
    %vm424 = vcmp.gt.f32.partialorder %v408, 0.0
    %vm425 = vcmp.gt.f32.partialorder %v409, 0.0
    %vm426 = vcmp.gt.f32.partialorder %v410, 0.0
    %v427 = vmul.f32 %v395, 0.2
    %v428 = vmul.f32 %v396, 0.2
    %v429 = vmul.f32 %v397, 0.2
    %v430 = vmul.f32 %v398, 0.2
    %v431 = vmul.f32 %v399, 0.2
    %v432 = vmul.f32 %v400, 0.2
    %v433 = vmul.f32 %v401, 0.2
    %v434 = vmul.f32 %v402, 0.2
    %v435 = vmul.f32 %v403, 0.2
    %v436 = vmul.f32 %v404, 0.2
    %v437 = vmul.f32 %v405, 0.2
    %v438 = vmul.f32 %v406, 0.2
    %v439 = vmul.f32 %v407, 0.2
    %v440 = vmul.f32 %v408, 0.2
    %v441 = vmul.f32 %v409, 0.2
    %v442 = vmul.f32 %v410, 0.2
    %v443 = vsel %vm411, %v395, %v427
    %v444 = vsel %vm412, %v396, %v428
    %v445 = vsel %vm413, %v397, %v429
    %v446 = vsel %vm414, %v398, %v430
    %v447 = vsel %vm415, %v399, %v431
    %v448 = vsel %vm416, %v400, %v432
    %v449 = vsel %vm417, %v401, %v433
    %v450 = vsel %vm418, %v402, %v434
    %v451 = vsel %vm419, %v403, %v435
    %v452 = vsel %vm420, %v404, %v436
    %v453 = vsel %vm421, %v405, %v437
    %v454 = vsel %vm422, %v406, %v438
    %v455 = vsel %vm423, %v407, %v439
    %v456 = vsel %vm424, %v408, %v440
    %v457 = vsel %vm425, %v409, %v441
    %v458 = vsel %vm426, %v410, %v442
    %v459 = vld [vmem:[%s7] sm:$0xff]
    %v460 = vld [vmem:[%s7 + $0x8] sm:$0xff]
    %v461 = vld [vmem:[%s7 + $0x10] sm:$0xff]
    %v462 = vld [vmem:[%s7 + $0x18] sm:$0xff]
    %v463 = vld [vmem:[%s8] sm:$0x1]
    %v465 = vperm.slane %v463, 0
    %v468 = vsel %vm164, %v443, 0
    %v471 = vsel %vm164, %v444, 0
    %v474 = vsel %vm164, %v445, 0
    %v477 = vsel %vm164, %v446, 0
    %v480 = vsel %vm164, %v447, 0
    %v483 = vsel %vm164, %v448, 0
    %v486 = vsel %vm164, %v449, 0
    %v489 = vsel %vm164, %v450, 0
    %v492 = vsel %vm164, %v451, 0
    %v495 = vsel %vm164, %v452, 0
    %v498 = vsel %vm164, %v453, 0
    %v501 = vsel %vm164, %v454, 0
    %v504 = vsel %vm164, %v455, 0
    %v507 = vsel %vm164, %v456, 0
    %v510 = vsel %vm164, %v457, 0
    %v513 = vsel %vm164, %v458, 0
    %515 = vmatpush.msra.mxu0 0.0
    %516 = vmatpush.msra.mxu0 0.0
    %517 = vmatpush.msra.mxu0 0.0
    %518 = vmatpush.msra.mxu0 0.0
    %519 = vmatpush.msra.mxu0 0.0
    %520 = vmatpush.msra.mxu0 0.0
    %521 = vmatpush.msra.mxu0 0.0
    %522 = vmatpush.msra.mxu0 0.0
    %523 = vmatpush.msra.mxu0 0.0
    %524 = vmatpush.msra.mxu0 0.0
    %525 = vmatpush.msra.mxu0 0.0
    %526 = vmatpush.msra.mxu0 0.0
    %527 = vmatpush.msra.mxu0 %v462
    %528 = vmatpush.msra.mxu0 %v461
    %529 = vmatpush.msra.mxu0 %v460
    %530 = vmatpush.msra.mxu0 %v459
    %531 = vmatmul.f32.gmra.mxu0 %v468
    %v532 = vpop.f32.mrf.mxu0
    %v533 = vadd.f32 %v465, %v532
    %534 = vmatmul.f32.gmra.mxu0 %v471
    %v535 = vpop.f32.mrf.mxu0
    %v536 = vadd.f32 %v465, %v535
    %537 = vmatmul.f32.gmra.mxu0 %v474
    %v538 = vpop.f32.mrf.mxu0
    %v539 = vadd.f32 %v465, %v538
    %540 = vmatmul.f32.gmra.mxu0 %v477
    %v541 = vpop.f32.mrf.mxu0
    %v542 = vadd.f32 %v465, %v541
    %543 = vmatmul.f32.gmra.mxu0 %v480
    %v544 = vpop.f32.mrf.mxu0
    %v545 = vadd.f32 %v465, %v544
    %546 = vmatmul.f32.gmra.mxu0 %v483
    %v547 = vpop.f32.mrf.mxu0
    %v548 = vadd.f32 %v465, %v547
    %549 = vmatmul.f32.gmra.mxu0 %v486
    %v550 = vpop.f32.mrf.mxu0
    %v551 = vadd.f32 %v465, %v550
    %552 = vmatmul.f32.gmra.mxu0 %v489
    %v553 = vpop.f32.mrf.mxu0
    %v554 = vadd.f32 %v465, %v553
    %555 = vmatmul.f32.gmra.mxu0 %v492
    %v556 = vpop.f32.mrf.mxu0
    %v557 = vadd.f32 %v465, %v556
    %558 = vmatmul.f32.gmra.mxu0 %v495
    %v559 = vpop.f32.mrf.mxu0
    %v560 = vadd.f32 %v465, %v559
    %561 = vmatmul.f32.gmra.mxu0 %v498
    %v562 = vpop.f32.mrf.mxu0
    %v563 = vadd.f32 %v465, %v562
    %564 = vmatmul.f32.gmra.mxu0 %v501
    %v565 = vpop.f32.mrf.mxu0
    %v566 = vadd.f32 %v465, %v565
    %567 = vmatmul.f32.gmra.mxu0 %v504
    %v568 = vpop.f32.mrf.mxu0
    %v569 = vadd.f32 %v465, %v568
    %570 = vmatmul.f32.gmra.mxu0 %v507
    %v571 = vpop.f32.mrf.mxu0
    %v572 = vadd.f32 %v465, %v571
    %573 = vmatmul.f32.gmra.mxu0 %v510
    %v574 = vpop.f32.mrf.mxu0
    %v575 = vadd.f32 %v465, %v574
    %576 = vmatmul.f32.gmra.mxu0 %v513
    %v577 = vpop.f32.mrf.mxu0
    %v578 = vadd.f32 %v465, %v577
    %579 = vdwg.mxu0
    %v580 = vld [vmem:[#allocation8] sm:$0xff]
    %v581 = vld [vmem:[#allocation11] sm:$0xff]
    %v582 = vld [vmem:[#allocation11 + $0x8] sm:$0xff]
    %v583 = vld [vmem:[#allocation11 + $0x10] sm:$0xff]
    %v584 = vld [vmem:[#allocation11 + $0x18] sm:$0xff]
    %v586 = vsel %vm164, %v580, 0
    %588 = vmatpush.msra.mxu0 0.0
    %589 = vmatpush.msra.mxu0 0.0
    %590 = vmatpush.msra.mxu0 0.0
    %591 = vmatpush.msra.mxu0 0.0
    %592 = vmatpush.msra.mxu0 0.0
    %593 = vmatpush.msra.mxu0 0.0
    %594 = vmatpush.msra.mxu0 0.0
    %595 = vmatpush.msra.mxu0 0.0
    %596 = vmatpush.msra.mxu0 0.0
    %597 = vmatpush.msra.mxu0 0.0
    %598 = vmatpush.msra.mxu0 0.0
    %599 = vmatpush.msra.mxu0 0.0
    %600 = vmatpush.msra.mxu0 %v584
    %601 = vmatpush.msra.mxu0 %v583
    %602 = vmatpush.msra.mxu0 %v582
    %603 = vmatpush.msra.mxu0 %v581
    %604 = vmatmul.f32.gmra.mxu0 %v586
    %v605 = vpop.f32.mrf.mxu0
    %v606 = vadd.f32 0.0, %v605
    %607 = vdwg.mxu0
    %v609 = vrot.slane %v606, 1
    %v610 = vrot.slane %v606, 2
    %v611 = vrot.slane %v606, 3
    %v612 = vrot.slane %v606, 4
    %v613 = vrot.slane %v606, 5
    %v614 = vrot.slane %v606, 6
    %v615 = vrot.slane %v606, 7
    %v616 = vperm.slane %v606, 0
    %v617 = vperm.slane %v609, 0
    %v618 = vperm.slane %v610, 0
    %v619 = vperm.slane %v611, 0
    %v620 = vperm.slane %v612, 0
    %v621 = vperm.slane %v613, 0
    %v622 = vperm.slane %v614, 0
    %v623 = vperm.slane %v615, 0
    %v632 = vadd.f32 %v533, %v616
    %v633 = vadd.f32 %v536, %v616
    %v634 = vadd.f32 %v539, %v617
    %v635 = vadd.f32 %v542, %v617
    %v636 = vadd.f32 %v545, %v618
    %v637 = vadd.f32 %v548, %v618
    %v638 = vadd.f32 %v551, %v619
    %v639 = vadd.f32 %v554, %v619
    %v640 = vadd.f32 %v557, %v620
    %v641 = vadd.f32 %v560, %v620
    %v642 = vadd.f32 %v563, %v621
    %v643 = vadd.f32 %v566, %v621
    %v644 = vadd.f32 %v569, %v622
    %v645 = vadd.f32 %v572, %v622
    %v646 = vadd.f32 %v575, %v623
    %v647 = vadd.f32 %v578, %v623
    %vm648 = vcmp.gt.f32.partialorder %v632, 0.0
    %vm649 = vcmp.gt.f32.partialorder %v633, 0.0
    %vm650 = vcmp.gt.f32.partialorder %v634, 0.0
    %vm651 = vcmp.gt.f32.partialorder %v635, 0.0
    %vm652 = vcmp.gt.f32.partialorder %v636, 0.0
    %vm653 = vcmp.gt.f32.partialorder %v637, 0.0
    %vm654 = vcmp.gt.f32.partialorder %v638, 0.0
    %vm655 = vcmp.gt.f32.partialorder %v639, 0.0
    %vm656 = vcmp.gt.f32.partialorder %v640, 0.0
    %vm657 = vcmp.gt.f32.partialorder %v641, 0.0
    %vm658 = vcmp.gt.f32.partialorder %v642, 0.0
    %vm659 = vcmp.gt.f32.partialorder %v643, 0.0
    %vm660 = vcmp.gt.f32.partialorder %v644, 0.0
    %vm661 = vcmp.gt.f32.partialorder %v645, 0.0
    %vm662 = vcmp.gt.f32.partialorder %v646, 0.0
    %vm663 = vcmp.gt.f32.partialorder %v647, 0.0
    %v664 = vmul.f32 %v632, 0.2
    %v665 = vmul.f32 %v633, 0.2
    %v666 = vmul.f32 %v634, 0.2
    %v667 = vmul.f32 %v635, 0.2
    %v668 = vmul.f32 %v636, 0.2
    %v669 = vmul.f32 %v637, 0.2
    %v670 = vmul.f32 %v638, 0.2
    %v671 = vmul.f32 %v639, 0.2
    %v672 = vmul.f32 %v640, 0.2
    %v673 = vmul.f32 %v641, 0.2
    %v674 = vmul.f32 %v642, 0.2
    %v675 = vmul.f32 %v643, 0.2
    %v676 = vmul.f32 %v644, 0.2
    %v677 = vmul.f32 %v645, 0.2
    %v678 = vmul.f32 %v646, 0.2
    %v679 = vmul.f32 %v647, 0.2
    %v680 = vsel %vm648, %v632, %v664
    %v681 = vsel %vm649, %v633, %v665
    %v682 = vsel %vm650, %v634, %v666
    %v683 = vsel %vm651, %v635, %v667
    %v684 = vsel %vm652, %v636, %v668
    %v685 = vsel %vm653, %v637, %v669
    %v686 = vsel %vm654, %v638, %v670
    %v687 = vsel %vm655, %v639, %v671
    %v688 = vsel %vm656, %v640, %v672
    %v689 = vsel %vm657, %v641, %v673
    %v690 = vsel %vm658, %v642, %v674
    %v691 = vsel %vm659, %v643, %v675
    %v692 = vsel %vm660, %v644, %v676
    %v693 = vsel %vm661, %v645, %v677
    %v694 = vsel %vm662, %v646, %v678
    %v695 = vsel %vm663, %v647, %v679
    %v696 = vld [vmem:[%s10] sm:$0x1]
    %v698 = vperm.slane %v696, 0
    %v700 = vmul.f32 %v680, %v698
    %v701 = vmul.f32 %v681, %v698
    %v702 = vmul.f32 %v682, %v698
    %v703 = vmul.f32 %v683, %v698
    %v704 = vmul.f32 %v684, %v698
    %v705 = vmul.f32 %v685, %v698
    %v706 = vmul.f32 %v686, %v698
    %v707 = vmul.f32 %v687, %v698
    %v708 = vmul.f32 %v688, %v698
    %v709 = vmul.f32 %v689, %v698
    %v710 = vmul.f32 %v690, %v698
    %v711 = vmul.f32 %v691, %v698
    %v712 = vmul.f32 %v692, %v698
    %v713 = vmul.f32 %v693, %v698
    %v714 = vmul.f32 %v694, %v698
    %v715 = vmul.f32 %v695, %v698
    %vm716 = vcmask 523264
    %v717 = vsel %vm716, %v700, 0.0
    %718 = vadd.xlane.f32.xlu0 %v717
    %v719 = vpop.xlane.xlu0 %718
    %v720 = vsel %vm716, %v701, 0.0
    %721 = vadd.xlane.f32.xlu0 %v720
    %v722 = vpop.xlane.xlu0 %721
    %v723 = vsel %vm716, %v702, 0.0
    %724 = vadd.xlane.f32.xlu0 %v723
    %v725 = vpop.xlane.xlu0 %724
    %v726 = vsel %vm716, %v703, 0.0
    %727 = vadd.xlane.f32.xlu0 %v726
    %v728 = vpop.xlane.xlu0 %727
    %v729 = vsel %vm716, %v704, 0.0
    %730 = vadd.xlane.f32.xlu0 %v729
    %v731 = vpop.xlane.xlu0 %730
    %v732 = vsel %vm716, %v705, 0.0
    %733 = vadd.xlane.f32.xlu0 %v732
    %v734 = vpop.xlane.xlu0 %733
    %v735 = vsel %vm716, %v706, 0.0
    %736 = vadd.xlane.f32.xlu0 %v735
    %v737 = vpop.xlane.xlu0 %736
    %v738 = vsel %vm716, %v707, 0.0
    %739 = vadd.xlane.f32.xlu0 %v738
    %v740 = vpop.xlane.xlu0 %739
    %v741 = vsel %vm716, %v708, 0.0
    %742 = vadd.xlane.f32.xlu0 %v741
    %v743 = vpop.xlane.xlu0 %742
    %v744 = vsel %vm716, %v709, 0.0
    %745 = vadd.xlane.f32.xlu0 %v744
    %v746 = vpop.xlane.xlu0 %745
    %v747 = vsel %vm716, %v710, 0.0
    %748 = vadd.xlane.f32.xlu0 %v747
    %v749 = vpop.xlane.xlu0 %748
    %v750 = vsel %vm716, %v711, 0.0
    %751 = vadd.xlane.f32.xlu0 %v750
    %v752 = vpop.xlane.xlu0 %751
    %v753 = vsel %vm716, %v712, 0.0
    %754 = vadd.xlane.f32.xlu0 %v753
    %v755 = vpop.xlane.xlu0 %754
    %v756 = vsel %vm716, %v713, 0.0
    %757 = vadd.xlane.f32.xlu0 %v756
    %v758 = vpop.xlane.xlu0 %757
    %v759 = vsel %vm716, %v714, 0.0
    %760 = vadd.xlane.f32.xlu0 %v759
    %v761 = vpop.xlane.xlu0 %760
    %v762 = vsel %vm716, %v715, 0.0
    %763 = vadd.xlane.f32.xlu0 %v762
    %v764 = vpop.xlane.xlu0 %763
    %v765 = vld [vmem:[#allocation2] sm:$0x1]
    %v767 = vperm.slane %v765, 0
    %768 = vset.pattern.permute.xlu0 0
    %769 = vperm.xlu0 %768, %v767
    %v770 = vpop.permute.xlu0 %769
    %v772 = vadd.f32 %v719, %v770
    %v773 = vadd.f32 %v722, %v770
    %v774 = vadd.f32 %v725, %v770
    %v775 = vadd.f32 %v728, %v770
    %v776 = vadd.f32 %v731, %v770
    %v777 = vadd.f32 %v734, %v770
    %v778 = vadd.f32 %v737, %v770
    %v779 = vadd.f32 %v740, %v770
    %v780 = vadd.f32 %v743, %v770
    %v781 = vadd.f32 %v746, %v770
    %v782 = vadd.f32 %v749, %v770
    %v783 = vadd.f32 %v752, %v770
    %v784 = vadd.f32 %v755, %v770
    %v785 = vadd.f32 %v758, %v770
    %v786 = vadd.f32 %v761, %v770
    %v787 = vadd.f32 %v764, %v770
    %v788 = vmul.f32 %v772, 1.442695
    %v789 = vpow.pop %v788
    %v790 = vmul.f32 %v773, 1.442695
    %v791 = vpow.pop %v790
    %v792 = vmul.f32 %v774, 1.442695
    %v793 = vpow.pop %v792
    %v794 = vmul.f32 %v775, 1.442695
    %v795 = vpow.pop %v794
    %v796 = vmul.f32 %v776, 1.442695
    %v797 = vpow.pop %v796
    %v798 = vmul.f32 %v777, 1.442695
    %v799 = vpow.pop %v798
    %v800 = vmul.f32 %v778, 1.442695
    %v801 = vpow.pop %v800
    %v802 = vmul.f32 %v779, 1.442695
    %v803 = vpow.pop %v802
    %v804 = vmul.f32 %v780, 1.442695
    %v805 = vpow.pop %v804
    %v806 = vmul.f32 %v781, 1.442695
    %v807 = vpow.pop %v806
    %v808 = vmul.f32 %v782, 1.442695
    %v809 = vpow.pop %v808
    %v810 = vmul.f32 %v783, 1.442695
    %v811 = vpow.pop %v810
    %v812 = vmul.f32 %v784, 1.442695
    %v813 = vpow.pop %v812
    %v814 = vmul.f32 %v785, 1.442695
    %v815 = vpow.pop %v814
    %v816 = vmul.f32 %v786, 1.442695
    %v817 = vpow.pop %v816
    %v818 = vmul.f32 %v787, 1.442695
    %v819 = vpow.pop %v818
    %v820 = vld [vmem:[#allocation9] sm:$0xff]
    %v822 = vperm.slane %v820, 0
    %v823 = vlaneseq
    %v824 = vshrl.u32 %v823, 7
    %826 = vset.pattern.permute.xlu0 %v824
    %827 = vperm.xlu0 %826, %v822
    %v828 = vpop.permute.xlu0 %827
    %v829 = vlaneseq
    %v830 = vshrl.u32 %v829, 7
    %v831 = vadd.s32 %v830, 8
    %832 = vset.pattern.permute.xlu0 %v831
    %833 = vperm.xlu0 %832, %v822
    %v834 = vpop.permute.xlu0 %833
    %v835 = vperm.slane %v820, 1
    %v836 = vlaneseq
    %v837 = vshrl.u32 %v836, 7
    %839 = vset.pattern.permute.xlu0 %v837
    %840 = vperm.xlu0 %839, %v835
    %v841 = vpop.permute.xlu0 %840
    %v842 = vlaneseq
    %v843 = vshrl.u32 %v842, 7
    %v844 = vadd.s32 %v843, 8
    %845 = vset.pattern.permute.xlu0 %v844
    %846 = vperm.xlu0 %845, %v835
    %v847 = vpop.permute.xlu0 %846
    %v848 = vperm.slane %v820, 2
    %v849 = vlaneseq
    %v850 = vshrl.u32 %v849, 7
    %852 = vset.pattern.permute.xlu0 %v850
    %853 = vperm.xlu0 %852, %v848
    %v854 = vpop.permute.xlu0 %853
    %v855 = vlaneseq
    %v856 = vshrl.u32 %v855, 7
    %v857 = vadd.s32 %v856, 8
    %858 = vset.pattern.permute.xlu0 %v857
    %859 = vperm.xlu0 %858, %v848
    %v860 = vpop.permute.xlu0 %859
    %v861 = vperm.slane %v820, 3
    %v862 = vlaneseq
    %v863 = vshrl.u32 %v862, 7
    %865 = vset.pattern.permute.xlu0 %v863
    %866 = vperm.xlu0 %865, %v861
    %v867 = vpop.permute.xlu0 %866
    %v868 = vlaneseq
    %v869 = vshrl.u32 %v868, 7
    %v870 = vadd.s32 %v869, 8
    %871 = vset.pattern.permute.xlu0 %v870
    %872 = vperm.xlu0 %871, %v861
    %v873 = vpop.permute.xlu0 %872
    %v874 = vperm.slane %v820, 4
    %v875 = vlaneseq
    %v876 = vshrl.u32 %v875, 7
    %878 = vset.pattern.permute.xlu0 %v876
    %879 = vperm.xlu0 %878, %v874
    %v880 = vpop.permute.xlu0 %879
    %v881 = vlaneseq
    %v882 = vshrl.u32 %v881, 7
    %v883 = vadd.s32 %v882, 8
    %884 = vset.pattern.permute.xlu0 %v883
    %885 = vperm.xlu0 %884, %v874
    %v886 = vpop.permute.xlu0 %885
    %v887 = vperm.slane %v820, 5
    %v888 = vlaneseq
    %v889 = vshrl.u32 %v888, 7
    %891 = vset.pattern.permute.xlu0 %v889
    %892 = vperm.xlu0 %891, %v887
    %v893 = vpop.permute.xlu0 %892
    %v894 = vlaneseq
    %v895 = vshrl.u32 %v894, 7
    %v896 = vadd.s32 %v895, 8
    %897 = vset.pattern.permute.xlu0 %v896
    %898 = vperm.xlu0 %897, %v887
    %v899 = vpop.permute.xlu0 %898
    %v900 = vperm.slane %v820, 6
    %v901 = vlaneseq
    %v902 = vshrl.u32 %v901, 7
    %904 = vset.pattern.permute.xlu0 %v902
    %905 = vperm.xlu0 %904, %v900
    %v906 = vpop.permute.xlu0 %905
    %v907 = vlaneseq
    %v908 = vshrl.u32 %v907, 7
    %v909 = vadd.s32 %v908, 8
    %910 = vset.pattern.permute.xlu0 %v909
    %911 = vperm.xlu0 %910, %v900
    %v912 = vpop.permute.xlu0 %911
    %v913 = vperm.slane %v820, 7
    %v914 = vlaneseq
    %v915 = vshrl.u32 %v914, 7
    %917 = vset.pattern.permute.xlu0 %v915
    %918 = vperm.xlu0 %917, %v913
    %v919 = vpop.permute.xlu0 %918
    %v920 = vlaneseq
    %v921 = vshrl.u32 %v920, 7
    %v922 = vadd.s32 %v921, 8
    %923 = vset.pattern.permute.xlu0 %v922
    %924 = vperm.xlu0 %923, %v913
    %v925 = vpop.permute.xlu0 %924
    %v942 = vmul.f32 %v789, %v828
    %v943 = vmul.f32 %v791, %v834
    %v944 = vmul.f32 %v793, %v841
    %v945 = vmul.f32 %v795, %v847
    %v946 = vmul.f32 %v797, %v854
    %v947 = vmul.f32 %v799, %v860
    %v948 = vmul.f32 %v801, %v867
    %v949 = vmul.f32 %v803, %v873
    %v950 = vmul.f32 %v805, %v880
    %v951 = vmul.f32 %v807, %v886
    %v952 = vmul.f32 %v809, %v893
    %v953 = vmul.f32 %v811, %v899
    %v954 = vmul.f32 %v813, %v906
    %v955 = vmul.f32 %v815, %v912
    %v956 = vmul.f32 %v817, %v919
    %v957 = vmul.f32 %v819, %v925
    %974 = vset.pattern.permute.xlu0 0
    %975 = vperm.xlu0 %974, %v942
    %v976 = vpop.permute.xlu0 %975
    %977 = vset.pattern.permute.xlu0 0
    %978 = vperm.xlu0 %977, %v943
    %v979 = vpop.permute.xlu0 %978
    %980 = vset.pattern.permute.xlu0 0
    %981 = vperm.xlu0 %980, %v944
    %v982 = vpop.permute.xlu0 %981
    %983 = vset.pattern.permute.xlu0 0
    %984 = vperm.xlu0 %983, %v945
    %v985 = vpop.permute.xlu0 %984
    %986 = vset.pattern.permute.xlu0 0
    %987 = vperm.xlu0 %986, %v946
    %v988 = vpop.permute.xlu0 %987
    %989 = vset.pattern.permute.xlu0 0
    %990 = vperm.xlu0 %989, %v947
    %v991 = vpop.permute.xlu0 %990
    %992 = vset.pattern.permute.xlu0 0
    %993 = vperm.xlu0 %992, %v948
    %v994 = vpop.permute.xlu0 %993
    %995 = vset.pattern.permute.xlu0 0
    %996 = vperm.xlu0 %995, %v949
    %v997 = vpop.permute.xlu0 %996
    %998 = vset.pattern.permute.xlu0 0
    %999 = vperm.xlu0 %998, %v950
    %v1000 = vpop.permute.xlu0 %999
    %1001 = vset.pattern.permute.xlu0 0
    %1002 = vperm.xlu0 %1001, %v951
    %v1003 = vpop.permute.xlu0 %1002
    %1004 = vset.pattern.permute.xlu0 0
    %1005 = vperm.xlu0 %1004, %v952
    %v1006 = vpop.permute.xlu0 %1005
    %1007 = vset.pattern.permute.xlu0 0
    %1008 = vperm.xlu0 %1007, %v953
    %v1009 = vpop.permute.xlu0 %1008
    %1010 = vset.pattern.permute.xlu0 0
    %1011 = vperm.xlu0 %1010, %v954
    %v1012 = vpop.permute.xlu0 %1011
    %1013 = vset.pattern.permute.xlu0 0
    %1014 = vperm.xlu0 %1013, %v955
    %v1015 = vpop.permute.xlu0 %1014
    %1016 = vset.pattern.permute.xlu0 0
    %1017 = vperm.xlu0 %1016, %v956
    %v1018 = vpop.permute.xlu0 %1017
    %1019 = vset.pattern.permute.xlu0 0
    %1020 = vperm.xlu0 %1019, %v957
    %v1021 = vpop.permute.xlu0 %1020
    %v1022 = vlaneseq
    %v1023 = vand.u32 %v1022, 127
    %v1024 = vperm.slane %v976, %v1023
    %v1025 = vadd.s32 %v1023, 4294967288
    %v1026 = vperm.slane %v979, %v1025
    %vm1027 = vcmask 130112
    %v1028 = vsel %vm1027, %v1026, %v1024
    %v1029 = vperm.slane %v982, %v1023
    %v1030 = vperm.slane %v985, %v1025
    %v1031 = vsel %vm1027, %v1030, %v1029
    %v1032 = vperm.slane %v988, %v1023
    %v1033 = vperm.slane %v991, %v1025
    %v1034 = vsel %vm1027, %v1033, %v1032
    %v1035 = vperm.slane %v994, %v1023
    %v1036 = vperm.slane %v997, %v1025
    %v1037 = vsel %vm1027, %v1036, %v1035
    %v1038 = vperm.slane %v1000, %v1023
    %v1039 = vperm.slane %v1003, %v1025
    %v1040 = vsel %vm1027, %v1039, %v1038
    %v1041 = vperm.slane %v1006, %v1023
    %v1042 = vperm.slane %v1009, %v1025
    %v1043 = vsel %vm1027, %v1042, %v1041
    %v1044 = vperm.slane %v1012, %v1023
    %v1045 = vperm.slane %v1015, %v1025
    %v1046 = vsel %vm1027, %v1045, %v1044
    %v1047 = vperm.slane %v1018, %v1023
    %v1048 = vperm.slane %v1021, %v1025
    %v1049 = vsel %vm1027, %v1048, %v1047
    %vm1050 = vcmask 1041409
    %v1051 = vsel %vm1050, %v1031, %v1028
    %vm1052 = vcmask 1042434
    %v1053 = vsel %vm1052, %v1034, %v1051
    %vm1054 = vcmask 1043459
    %v1055 = vsel %vm1054, %v1037, %v1053
    %vm1056 = vcmask 1044484
    %v1057 = vsel %vm1056, %v1040, %v1055
    %vm1058 = vcmask 1045509
    %v1059 = vsel %vm1058, %v1043, %v1057
    %vm1060 = vcmask 1046534
    %v1061 = vsel %vm1060, %v1046, %v1059
    %vm1062 = vcmask 1047559
    %v1063 = vsel %vm1062, %v1049, %v1061
    %vm1065 = vcmask 130048
    %v1066 = vsel %vm1065, %v1063, 0.0
    %1067 = vadd.xlane.f32.xlu0 %v1066
    %v1068 = vpop.xlane.xlu0 %1067
    %v1069 = vadd.f32 %v1068, 1e-10
    %v1071 = vperm.slane %v1069, 0
    %v1072 = vperm.slane %v1069, 1
    %v1073 = vperm.slane %v1069, 2
    %v1074 = vperm.slane %v1069, 3
    %v1075 = vperm.slane %v1069, 4
    %v1076 = vperm.slane %v1069, 5
    %v1077 = vperm.slane %v1069, 6
    %v1078 = vperm.slane %v1069, 7
    %v1087 = vrcp.pop %v1071
    %v1088 = vmul.f32 %v1071, %v1087
    %v1089 = vsub.f32 1.0, %v1088
    %v1090 = vmul.f32 %v1087, %v1089
    %v1091 = vadd.f32 %v1087, %v1090
    %vm1092 = vweird.f32 %v1071
    %vm1093 = vweird.f32 %v1087
    %vm1094 = vmor %vm1092, %vm1093
    %v1095 = vsel %vm1094, %v1087, %v1091
    %v1096 = vand.u32 2147483647, %v1071
    %vm1097 = vcmp.eq.f32.partialorder %v1096, 8.507059e+37
    %v1098 = vand.u32 %v1071, 2147483648
    %v1099 = vor.u32 1.1754944e-38, %v1098
    %v1100 = vsel %vm1097, %v1099, %v1095
    %v1101 = vmul.f32 %v942, %v1100
    %v1102 = vmul.f32 %v943, %v1100
    %v1103 = vrcp.pop %v1072
    %v1104 = vmul.f32 %v1072, %v1103
    %v1105 = vsub.f32 1.0, %v1104
    %v1106 = vmul.f32 %v1103, %v1105
    %v1107 = vadd.f32 %v1103, %v1106
    %vm1108 = vweird.f32 %v1072
    %vm1109 = vweird.f32 %v1103
    %vm1110 = vmor %vm1108, %vm1109
    %v1111 = vsel %vm1110, %v1103, %v1107
    %v1112 = vand.u32 2147483647, %v1072
    %vm1113 = vcmp.eq.f32.partialorder %v1112, 8.507059e+37
    %v1114 = vand.u32 %v1072, 2147483648
    %v1115 = vor.u32 1.1754944e-38, %v1114
    %v1116 = vsel %vm1113, %v1115, %v1111
    %v1117 = vmul.f32 %v944, %v1116
    %v1118 = vmul.f32 %v945, %v1116
    %v1119 = vrcp.pop %v1073
    %v1120 = vmul.f32 %v1073, %v1119
    %v1121 = vsub.f32 1.0, %v1120
    %v1122 = vmul.f32 %v1119, %v1121
    %v1123 = vadd.f32 %v1119, %v1122
    %vm1124 = vweird.f32 %v1073
    %vm1125 = vweird.f32 %v1119
    %vm1126 = vmor %vm1124, %vm1125
    %v1127 = vsel %vm1126, %v1119, %v1123
    %v1128 = vand.u32 2147483647, %v1073
    %vm1129 = vcmp.eq.f32.partialorder %v1128, 8.507059e+37
    %v1130 = vand.u32 %v1073, 2147483648
    %v1131 = vor.u32 1.1754944e-38, %v1130
    %v1132 = vsel %vm1129, %v1131, %v1127
    %v1133 = vmul.f32 %v946, %v1132
    %v1134 = vmul.f32 %v947, %v1132
    %v1135 = vrcp.pop %v1074
    %v1136 = vmul.f32 %v1074, %v1135
    %v1137 = vsub.f32 1.0, %v1136
    %v1138 = vmul.f32 %v1135, %v1137
    %v1139 = vadd.f32 %v1135, %v1138
    %vm1140 = vweird.f32 %v1074
    %vm1141 = vweird.f32 %v1135
    %vm1142 = vmor %vm1140, %vm1141
    %v1143 = vsel %vm1142, %v1135, %v1139
    %v1144 = vand.u32 2147483647, %v1074
    %vm1145 = vcmp.eq.f32.partialorder %v1144, 8.507059e+37
    %v1146 = vand.u32 %v1074, 2147483648
    %v1147 = vor.u32 1.1754944e-38, %v1146
    %v1148 = vsel %vm1145, %v1147, %v1143
    %v1149 = vmul.f32 %v948, %v1148
    %v1150 = vmul.f32 %v949, %v1148
    %v1151 = vrcp.pop %v1075
    %v1152 = vmul.f32 %v1075, %v1151
    %v1153 = vsub.f32 1.0, %v1152
    %v1154 = vmul.f32 %v1151, %v1153
    %v1155 = vadd.f32 %v1151, %v1154
    %vm1156 = vweird.f32 %v1075
    %vm1157 = vweird.f32 %v1151
    %vm1158 = vmor %vm1156, %vm1157
    %v1159 = vsel %vm1158, %v1151, %v1155
    %v1160 = vand.u32 2147483647, %v1075
    %vm1161 = vcmp.eq.f32.partialorder %v1160, 8.507059e+37
    %v1162 = vand.u32 %v1075, 2147483648
    %v1163 = vor.u32 1.1754944e-38, %v1162
    %v1164 = vsel %vm1161, %v1163, %v1159
    %v1165 = vmul.f32 %v950, %v1164
    %v1166 = vmul.f32 %v951, %v1164
    %v1167 = vrcp.pop %v1076
    %v1168 = vmul.f32 %v1076, %v1167
    %v1169 = vsub.f32 1.0, %v1168
    %v1170 = vmul.f32 %v1167, %v1169
    %v1171 = vadd.f32 %v1167, %v1170
    %vm1172 = vweird.f32 %v1076
    %vm1173 = vweird.f32 %v1167
    %vm1174 = vmor %vm1172, %vm1173
    %v1175 = vsel %vm1174, %v1167, %v1171
    %v1176 = vand.u32 2147483647, %v1076
    %vm1177 = vcmp.eq.f32.partialorder %v1176, 8.507059e+37
    %v1178 = vand.u32 %v1076, 2147483648
    %v1179 = vor.u32 1.1754944e-38, %v1178
    %v1180 = vsel %vm1177, %v1179, %v1175
    %v1181 = vmul.f32 %v952, %v1180
    %v1182 = vmul.f32 %v953, %v1180
    %v1183 = vrcp.pop %v1077
    %v1184 = vmul.f32 %v1077, %v1183
    %v1185 = vsub.f32 1.0, %v1184
    %v1186 = vmul.f32 %v1183, %v1185
    %v1187 = vadd.f32 %v1183, %v1186
    %vm1188 = vweird.f32 %v1077
    %vm1189 = vweird.f32 %v1183
    %vm1190 = vmor %vm1188, %vm1189
    %v1191 = vsel %vm1190, %v1183, %v1187
    %v1192 = vand.u32 2147483647, %v1077
    %vm1193 = vcmp.eq.f32.partialorder %v1192, 8.507059e+37
    %v1194 = vand.u32 %v1077, 2147483648
    %v1195 = vor.u32 1.1754944e-38, %v1194
    %v1196 = vsel %vm1193, %v1195, %v1191
    %v1197 = vmul.f32 %v954, %v1196
    %v1198 = vmul.f32 %v955, %v1196
    %v1199 = vrcp.pop %v1078
    %v1200 = vmul.f32 %v1078, %v1199
    %v1201 = vsub.f32 1.0, %v1200
    %v1202 = vmul.f32 %v1199, %v1201
    %v1203 = vadd.f32 %v1199, %v1202
    %vm1204 = vweird.f32 %v1078
    %vm1205 = vweird.f32 %v1199
    %vm1206 = vmor %vm1204, %vm1205
    %v1207 = vsel %vm1206, %v1199, %v1203
    %v1208 = vand.u32 2147483647, %v1078
    %vm1209 = vcmp.eq.f32.partialorder %v1208, 8.507059e+37
    %v1210 = vand.u32 %v1078, 2147483648
    %v1211 = vor.u32 1.1754944e-38, %v1210
    %v1212 = vsel %vm1209, %v1211, %v1207
    %v1213 = vmul.f32 %v956, %v1212
    %v1214 = vmul.f32 %v957, %v1212
    %1216 = vset.pattern.permute.xlu0 0
    %1217 = vperm.xlu0 %1216, %v1101
    %v1218 = vpop.permute.xlu0 %1217
    %1221 = vset.pattern.permute.xlu0 0
    %1222 = vperm.xlu0 %1221, %v1102
    %v1223 = vpop.permute.xlu0 %1222
    %1226 = vset.pattern.permute.xlu0 0
    %1227 = vperm.xlu0 %1226, %v1117
    %v1228 = vpop.permute.xlu0 %1227
    %1231 = vset.pattern.permute.xlu0 0
    %1232 = vperm.xlu0 %1231, %v1118
    %v1233 = vpop.permute.xlu0 %1232
    %1236 = vset.pattern.permute.xlu0 0
    %1237 = vperm.xlu0 %1236, %v1133
    %v1238 = vpop.permute.xlu0 %1237
    %1241 = vset.pattern.permute.xlu0 0
    %1242 = vperm.xlu0 %1241, %v1134
    %v1243 = vpop.permute.xlu0 %1242
    %1246 = vset.pattern.permute.xlu0 0
    %1247 = vperm.xlu0 %1246, %v1149
    %v1248 = vpop.permute.xlu0 %1247
    %1251 = vset.pattern.permute.xlu0 0
    %1252 = vperm.xlu0 %1251, %v1150
    %v1253 = vpop.permute.xlu0 %1252
    %1256 = vset.pattern.permute.xlu0 0
    %1257 = vperm.xlu0 %1256, %v1165
    %v1258 = vpop.permute.xlu0 %1257
    %1261 = vset.pattern.permute.xlu0 0
    %1262 = vperm.xlu0 %1261, %v1166
    %v1263 = vpop.permute.xlu0 %1262
    %1266 = vset.pattern.permute.xlu0 0
    %1267 = vperm.xlu0 %1266, %v1181
    %v1268 = vpop.permute.xlu0 %1267
    %1271 = vset.pattern.permute.xlu0 0
    %1272 = vperm.xlu0 %1271, %v1182
    %v1273 = vpop.permute.xlu0 %1272
    %1276 = vset.pattern.permute.xlu0 0
    %1277 = vperm.xlu0 %1276, %v1197
    %v1278 = vpop.permute.xlu0 %1277
    %1281 = vset.pattern.permute.xlu0 0
    %1282 = vperm.xlu0 %1281, %v1198
    %v1283 = vpop.permute.xlu0 %1282
    %1286 = vset.pattern.permute.xlu0 0
    %1287 = vperm.xlu0 %1286, %v1213
    %v1288 = vpop.permute.xlu0 %1287
    %1291 = vset.pattern.permute.xlu0 0
    %1292 = vperm.xlu0 %1291, %v1214
    %v1293 = vpop.permute.xlu0 %1292
    %v1295 = vmul.f32 %v1218, %v533
    %v1296 = vmul.f32 %v1223, %v536
    %v1297 = vmul.f32 %v1228, %v539
    %v1298 = vmul.f32 %v1233, %v542
    %v1299 = vmul.f32 %v1238, %v545
    %v1300 = vmul.f32 %v1243, %v548
    %v1301 = vmul.f32 %v1248, %v551
    %v1302 = vmul.f32 %v1253, %v554
    %v1303 = vmul.f32 %v1258, %v557
    %v1304 = vmul.f32 %v1263, %v560
    %v1305 = vmul.f32 %v1268, %v563
    %v1306 = vmul.f32 %v1273, %v566
    %v1307 = vmul.f32 %v1278, %v569
    %v1308 = vmul.f32 %v1283, %v572
    %v1309 = vmul.f32 %v1288, %v575
    %v1310 = vmul.f32 %v1293, %v578
    %v1311 = vsel %vm716, %v1295, 0.0
    %v1312 = vsel %vm716, %v1296, 0.0
    %v1313 = vadd.f32 %v1311, %v1312
    %v1314 = vrot.slane %v1313, 4
    %v1315 = vadd.f32 %v1313, %v1314
    %v1316 = vrot.slane %v1315, 2
    %v1317 = vadd.f32 %v1315, %v1316
    %v1318 = vrot.slane %v1317, 1
    %v1319 = vadd.f32 %v1317, %v1318
    %v1320 = vsel %vm716, %v1297, 0.0
    %v1321 = vsel %vm716, %v1298, 0.0
    %v1322 = vadd.f32 %v1320, %v1321
    %v1323 = vrot.slane %v1322, 4
    %v1324 = vadd.f32 %v1322, %v1323
    %v1325 = vrot.slane %v1324, 2
    %v1326 = vadd.f32 %v1324, %v1325
    %v1327 = vrot.slane %v1326, 1
    %v1328 = vadd.f32 %v1326, %v1327
    %v1329 = vsel %vm716, %v1299, 0.0
    %v1330 = vsel %vm716, %v1300, 0.0
    %v1331 = vadd.f32 %v1329, %v1330
    %v1332 = vrot.slane %v1331, 4
    %v1333 = vadd.f32 %v1331, %v1332
    %v1334 = vrot.slane %v1333, 2
    %v1335 = vadd.f32 %v1333, %v1334
    %v1336 = vrot.slane %v1335, 1
    %v1337 = vadd.f32 %v1335, %v1336
    %v1338 = vsel %vm716, %v1301, 0.0
    %v1339 = vsel %vm716, %v1302, 0.0
    %v1340 = vadd.f32 %v1338, %v1339
    %v1341 = vrot.slane %v1340, 4
    %v1342 = vadd.f32 %v1340, %v1341
    %v1343 = vrot.slane %v1342, 2
    %v1344 = vadd.f32 %v1342, %v1343
    %v1345 = vrot.slane %v1344, 1
    %v1346 = vadd.f32 %v1344, %v1345
    %v1347 = vsel %vm716, %v1303, 0.0
    %v1348 = vsel %vm716, %v1304, 0.0
    %v1349 = vadd.f32 %v1347, %v1348
    %v1350 = vrot.slane %v1349, 4
    %v1351 = vadd.f32 %v1349, %v1350
    %v1352 = vrot.slane %v1351, 2
    %v1353 = vadd.f32 %v1351, %v1352
    %v1354 = vrot.slane %v1353, 1
    %v1355 = vadd.f32 %v1353, %v1354
    %v1356 = vsel %vm716, %v1305, 0.0
    %v1357 = vsel %vm716, %v1306, 0.0
    %v1358 = vadd.f32 %v1356, %v1357
    %v1359 = vrot.slane %v1358, 4
    %v1360 = vadd.f32 %v1358, %v1359
    %v1361 = vrot.slane %v1360, 2
    %v1362 = vadd.f32 %v1360, %v1361
    %v1363 = vrot.slane %v1362, 1
    %v1364 = vadd.f32 %v1362, %v1363
    %v1365 = vsel %vm716, %v1307, 0.0
    %v1366 = vsel %vm716, %v1308, 0.0
    %v1367 = vadd.f32 %v1365, %v1366
    %v1368 = vrot.slane %v1367, 4
    %v1369 = vadd.f32 %v1367, %v1368
    %v1370 = vrot.slane %v1369, 2
    %v1371 = vadd.f32 %v1369, %v1370
    %v1372 = vrot.slane %v1371, 1
    %v1373 = vadd.f32 %v1371, %v1372
    %v1374 = vsel %vm716, %v1309, 0.0
    %v1375 = vsel %vm716, %v1310, 0.0
    %v1376 = vadd.f32 %v1374, %v1375
    %v1377 = vrot.slane %v1376, 4
    %v1378 = vadd.f32 %v1376, %v1377
    %v1379 = vrot.slane %v1378, 2
    %v1380 = vadd.f32 %v1378, %v1379
    %v1381 = vrot.slane %v1380, 1
    %v1382 = vadd.f32 %v1380, %v1381
    %v1383 = vld [vmem:[%s12] sm:$0xff]
    %v1384 = vld [vmem:[%s12 + $0x8] sm:$0xff]
    %v1385 = vld [vmem:[%s12 + $0x10] sm:$0xff]
    %v1386 = vld [vmem:[%s12 + $0x18] sm:$0xff]
    %v1387 = vld [vmem:[%s12 + $0x20] sm:$0xff]
    %v1388 = vld [vmem:[%s12 + $0x28] sm:$0xff]
    %v1389 = vld [vmem:[%s12 + $0x30] sm:$0xff]
    %v1390 = vld [vmem:[%s12 + $0x38] sm:$0xff]
    %v1391 = vld [vmem:[%s13] sm:$0x1]
    %v1393 = vperm.slane %v1391, 0
    %v1403 = vsel %vm1050, %v1328, %v1319
    %v1404 = vsel %vm1052, %v1337, %v1403
    %v1405 = vsel %vm1054, %v1346, %v1404
    %v1406 = vsel %vm1056, %v1355, %v1405
    %v1407 = vsel %vm1058, %v1364, %v1406
    %v1408 = vsel %vm1060, %v1373, %v1407
    %v1409 = vsel %vm1062, %v1382, %v1408
    %v1410 = vsel %vm716, %v1409, 0
    %1412 = vmatpush.msra.mxu0 0.0
    %1413 = vmatpush.msra.mxu0 0.0
    %1414 = vmatpush.msra.mxu0 0.0
    %1415 = vmatpush.msra.mxu0 0.0
    %1416 = vmatpush.msra.mxu0 0.0
    %1417 = vmatpush.msra.mxu0 0.0
    %1418 = vmatpush.msra.mxu0 0.0
    %1419 = vmatpush.msra.mxu0 0.0
    %1420 = vmatpush.msra.mxu0 %v1390
    %1421 = vmatpush.msra.mxu0 %v1389
    %1422 = vmatpush.msra.mxu0 %v1388
    %1423 = vmatpush.msra.mxu0 %v1387
    %1424 = vmatpush.msra.mxu0 %v1386
    %1425 = vmatpush.msra.mxu0 %v1385
    %1426 = vmatpush.msra.mxu0 %v1384
    %1427 = vmatpush.msra.mxu0 %v1383
    %1428 = vmatmul.f32.gmra.mxu0 %v1410
    %v1429 = vpop.f32.mrf.mxu0
    %v1430 = vadd.f32 %v1393, %v1429
    %1431 = vdwg.mxu0
    %v1432 = vmax.f32 %v1430, 0.0
    %1433 = vst.msk [vmem:[#allocation12] sm:$0xff] %vm164, %v1432
    // Predicated region
    $region78: #{tpu_custom_call.1} parent=1 // pred_check
      _
    $region79: #{tpu_custom_call.1} parent=1 // pred_check_branch
      %1435 = sbr.rel (0) target = $region81
    $region80: #{tpu_custom_call.1} parent=1 // pred_region
      %1437 = vsyncadd [#allocation5], 0
      %s1439 = sshll.u32 [#allocation12], 4
      %s1440 = int_to_ptr.vmem [resolvable:$true] %s1439
      %s1441 = sshll.u32 %s14, 4
      %s1442 = int_to_ptr.hbm [resolvable:$true] %s1441
      %1444 = dma.vmem_to_hbm [thread:$0]  %s1440, 128, %s1442, [#allocation5]
    $region81: #{tpu_custom_call.1} parent=1 // pred_fallthru
      _
    // Predicated region
    $region82: #{tpu_custom_call.1} parent=1 // pred_check
      _
    $region83: #{tpu_custom_call.1} parent=1 // pred_check_branch
      %1446 = sbr.rel (0) target = $region85
    $region84: #{tpu_custom_call.1} parent=1 // pred_region
      %1448 = dma.done [#allocation5], 128
    $region85: #{tpu_custom_call.1} parent=1 // pred_fallthru
      _
    %1449 = vsyncpa [#allocation4], 1
    %1450 = vsyncpa [#allocation7], 1
    %1451 = vsyncpa [#allocation10], 1
    %1452 = vsyncpa [#allocation5], 1

</llo_original>
